<compile_context>
chip_gen: v6e
topology: v6e:2x2x1
jax: 0.10.0
libtpu: 0.0.40
codegen_flags: <defaults>
</compile_context>

<pallas_src>
import functools
import math

import jax
import jax.numpy as jnp
from jax import lax
from jax.experimental import pallas as pl
from jax.experimental.pallas import tpu as pltpu

VMEM_LIMIT = 32 * 1024 * 1024  # safe scoped-VMEM limit on v5e / v6e / v7x


# ----------------------------- kernel helpers -----------------------------

def _mha_epilogue(x, q, k, v, wo, bo, g, b, amask, num_heads, scale, cd):
    """Per-head attention + head projection + residual + LayerNorm.

    x: (S, D) residual input (f32), q: (S, D), k/v: (T, D), wo: (D, D),
    bo/g/b: (1, D), amask: (S, T) additive mask or None.
    Matmul inputs are cast to `cd` (f32 or bf16); accumulation / softmax / LN in f32.
    """
    S, D = q.shape
    Dh = D // num_heads
    out = jnp.zeros_like(x)  # f32 accumulator for sum_h y_h @ wo[h]
    for h in range(num_heads):
        sl = slice(h * Dh, (h + 1) * Dh)
        q_h = q[:, sl].astype(cd)
        k_h = k[:, sl].astype(cd)
        v_h = v[:, sl].astype(cd)
        # scores: q_h @ k_h^T  (contract last dims; avoids an explicit transpose)
        s = lax.dot_general(q_h, k_h, (((1,), (1,)), ((), ())),
                            preferred_element_type=jnp.float32) * scale
        if amask is not None:
            s = s + amask
        s = s - jnp.max(s, axis=-1, keepdims=True)
        p = jnp.exp(s)
        p = p * pl.reciprocal(jnp.sum(p, axis=-1, keepdims=True), approx=True)
        y_h = jnp.dot(p.astype(cd), v_h, preferred_element_type=jnp.float32)
        # fold the head projection directly: y_h @ wo[h*Dh:(h+1)*Dh, :]
        out = out + jnp.dot(y_h.astype(cd), wo[sl, :].astype(cd),
                            preferred_element_type=jnp.float32)
    out = out + bo
    # residual + LayerNorm (eps = 1e-5, PyTorch default), always f32
    z = x + out
    mean = jnp.mean(z, axis=-1, keepdims=True)
    var = jnp.mean((z - mean) ** 2, axis=-1, keepdims=True)
    zn = (z - mean) * lax.rsqrt(var + 1e-5)
    return zn * g + b


# ----------------------------- Pallas kernels -----------------------------

def self_attn_block_kernel(x_ref, wqkv_ref, bqkv_ref, wo_ref, bo_ref, g_ref, b_ref,
                           amask_ref, o_ref, *, num_heads, scale, compute_dtype):
    # x block: (1, S, D); weights resident across the whole grid.
    D = x_ref.shape[2]
    cd = compute_dtype
    x = x_ref[0]                                                        # (S, D) f32
    qkv = jnp.dot(x.astype(cd), wqkv_ref[...].astype(cd),
                  preferred_element_type=jnp.float32) + bqkv_ref[...]   # (S, 3D)
    q, k, v = qkv[:, :D], qkv[:, D:2 * D], qkv[:, 2 * D:]
    o_ref[0] = _mha_epilogue(x, q, k, v, wo_ref[...], bo_ref[...],
                             g_ref[...], b_ref[...], amask_ref[...],
                             num_heads, scale, cd)


def cross_attn_block_kernel(x_ref, c_ref, wq_ref, bq_ref, wkv_ref, bkv_ref,
                            wo_ref, bo_ref, g_ref, b_ref, o_ref,
                            *, num_heads, scale, compute_dtype):
    D = x_ref.shape[2]
    cd = compute_dtype
    x = x_ref[0]                                                        # (S, D)
    c = c_ref[0]                                                        # (T, D)
    q = jnp.dot(x.astype(cd), wq_ref[...].astype(cd),
                preferred_element_type=jnp.float32) + bq_ref[...]       # (S, D)
    kv = jnp.dot(c.astype(cd), wkv_ref[...].astype(cd),
                 preferred_element_type=jnp.float32) + bkv_ref[...]     # (T, 2D)
    k, v = kv[:, :D], kv[:, D:]
    o_ref[0] = _mha_epilogue(x, q, k, v, wo_ref[...], bo_ref[...],
                             g_ref[...], b_ref[...], None,
                             num_heads, scale, cd)


def ffn_block_kernel(x_ref, w1_ref, b1_ref, w2_ref, b2_ref, g_ref, b_ref, o_ref,
                     *, compute_dtype):
    cd = compute_dtype
    x = x_ref[...]                                                      # (bm, D) f32
    h = jnp.dot(x.astype(cd), w1_ref[...].astype(cd),
                preferred_element_type=jnp.float32) + b1_ref[...]
    h = jnp.maximum(h, 0.0)
    f = jnp.dot(h.astype(cd), w2_ref[...].astype(cd),
                preferred_element_type=jnp.float32) + b2_ref[...]
    z = x + f
    mean = jnp.mean(z, axis=-1, keepdims=True)
    var = jnp.mean((z - mean) ** 2, axis=-1, keepdims=True)
    o_ref[...] = ((z - mean) * lax.rsqrt(var + 1e-5)) * g_ref[...] + b_ref[...]


# ----------------------------- Pallas wrappers -----------------------------

def self_attention_block(x, wqkv, bqkv, wo, bo, g, b, amask, *, num_heads, compute_dtype):
    N, S, D = x.shape
    kernel = functools.partial(self_attn_block_kernel, num_heads=num_heads,
                               scale=1.0 / math.sqrt(D), compute_dtype=compute_dtype)
    return pl.pallas_call(
        kernel,
        out_shape=jax.ShapeDtypeStruct((N, S, D), jnp.float32),
        grid=(N,),
        in_specs=[
            pl.BlockSpec((1, S, D), lambda n: (n, 0, 0)),     # x
            pl.BlockSpec((D, 3 * D), lambda n: (0, 0)),       # wqkv (pinned)
            pl.BlockSpec((1, 3 * D), lambda n: (0, 0)),       # bqkv (pinned)
            pl.BlockSpec((D, D), lambda n: (0, 0)),           # wo
            pl.BlockSpec((1, D), lambda n: (0, 0)),           # bo
            pl.BlockSpec((1, D), lambda n: (0, 0)),           # ln gamma
            pl.BlockSpec((1, D), lambda n: (0, 0)),           # ln beta
            pl.BlockSpec((S, S), lambda n: (0, 0)),           # additive mask (precomputed)
        ],
        out_specs=pl.BlockSpec((1, S, D), lambda n: (n, 0, 0)),
        compiler_params=pltpu.CompilerParams(
            dimension_semantics=("parallel",), vmem_limit_bytes=VMEM_LIMIT),
    )(x, wqkv, bqkv.reshape(1, -1), wo, bo.reshape(1, -1),
      g.reshape(1, -1), b.reshape(1, -1), amask)


def cross_attention_block(x, cond, wq, bq, wkv, bkv, wo, bo, g, b, *, num_heads, compute_dtype):
    N, S, D = x.shape
    T = cond.shape[1]
    kernel = functools.partial(cross_attn_block_kernel, num_heads=num_heads,
                               scale=1.0 / math.sqrt(D), compute_dtype=compute_dtype)
    return pl.pallas_call(
        kernel,
        out_shape=jax.ShapeDtypeStruct((N, S, D), jnp.float32),
        grid=(N,),
        in_specs=[
            pl.BlockSpec((1, S, D), lambda n: (n, 0, 0)),     # x (queries)
            pl.BlockSpec((1, T, D), lambda n: (n, 0, 0)),     # cond (keys/values)
            pl.BlockSpec((D, D), lambda n: (0, 0)),           # wq
            pl.BlockSpec((1, D), lambda n: (0, 0)),           # bq
            pl.BlockSpec((D, 2 * D), lambda n: (0, 0)),       # wkv (pinned)
            pl.BlockSpec((1, 2 * D), lambda n: (0, 0)),       # bkv
            pl.BlockSpec((D, D), lambda n: (0, 0)),           # wo
            pl.BlockSpec((1, D), lambda n: (0, 0)),           # bo
            pl.BlockSpec((1, D), lambda n: (0, 0)),           # ln gamma
            pl.BlockSpec((1, D), lambda n: (0, 0)),           # ln beta
        ],
        out_specs=pl.BlockSpec((1, S, D), lambda n: (n, 0, 0)),
        compiler_params=pltpu.CompilerParams(
            dimension_semantics=("parallel",), vmem_limit_bytes=VMEM_LIMIT),
    )(x, cond, wq, bq.reshape(1, -1), wkv, bkv.reshape(1, -1),
      wo, bo.reshape(1, -1), g.reshape(1, -1), b.reshape(1, -1))


def ffn_block(x, w1, b1, w2, b2, g, b, *, compute_dtype, block_rows=256):
    N, S, D = x.shape
    M = N * S
    dff = w1.shape[1]
    x2 = x.reshape(M, D)
    bm = M if M <= block_rows else block_rows          # multiple of 8 when tiling
    grid = (pl.cdiv(M, bm),)
    out = pl.pallas_call(
        functools.partial(ffn_block_kernel, compute_dtype=compute_dtype),
        out_shape=jax.ShapeDtypeStruct((M, D), jnp.float32),
        grid=grid,
        in_specs=[
            pl.BlockSpec((bm, D), lambda i: (i, 0)),          # activation tile
            pl.BlockSpec((D, dff), lambda i: (0, 0)),         # w1 (pinned)
            pl.BlockSpec((1, dff), lambda i: (0, 0)),         # b1
            pl.BlockSpec((dff, D), lambda i: (0, 0)),         # w2 (pinned)
            pl.BlockSpec((1, D), lambda i: (0, 0)),           # b2
            pl.BlockSpec((1, D), lambda i: (0, 0)),           # ln gamma
            pl.BlockSpec((1, D), lambda i: (0, 0)),           # ln beta
        ],
        out_specs=pl.BlockSpec((bm, D), lambda i: (i, 0)),
        compiler_params=pltpu.CompilerParams(
            dimension_semantics=("parallel",), vmem_limit_bytes=VMEM_LIMIT),
    )(x2, w1, b1.reshape(1, -1), w2, b2.reshape(1, -1), g.reshape(1, -1), b.reshape(1, -1))
    return out.reshape(N, S, D)


# ----------------------------- DecoderLayer forward -----------------------------

def decoder_layer_forward(params, seq, cond, mask, *, num_heads, compute_dtype=jnp.float32):
    # Additive mask precomputed ONCE in the wrapper (same as torch: -1e10 * (1 - mask)).
    amask = (-1e10) * (1.0 - mask.astype(jnp.float32))

    sa = params["self_attn"]
    wqkv = jnp.concatenate([sa["wq"], sa["wk"], sa["wv"]], axis=1)     # (D, 3D)
    bqkv = jnp.concatenate([sa["bq"], sa["bk"], sa["bv"]], axis=0)     # (3D,)
    x = self_attention_block(seq, wqkv, bqkv, sa["wo"], sa["bo"], sa["ln_g"], sa["ln_b"],
                             amask, num_heads=num_heads, compute_dtype=compute_dtype)

    ca = params["cross_attn"]
    wkv = jnp.concatenate([ca["wk"], ca["wv"]], axis=1)                # (D, 2D)
    bkv = jnp.concatenate([ca["bk"], ca["bv"]], axis=0)                # (2D,)
    x = cross_attention_block(x, cond, ca["wq"], ca["bq"], wkv, bkv, ca["wo"], ca["bo"],
                              ca["ln_g"], ca["ln_b"],
                              num_heads=num_heads, compute_dtype=compute_dtype)

    x = ffn_block(x, params["ffn_w1"], params["ffn_b1"], params["ffn_w2"], params["ffn_b2"],
                  params["ffn_ln_g"], params["ffn_ln_b"], compute_dtype=compute_dtype)
    return x


# ----------------------------- pure-JAX reference (verification) -----------------------------

def _ref_mha(xq, xkv, p, mask, H):
    N, S, D = xq.shape
    T = xkv.shape[1]
    Dh = D // H
    q = (xq @ p["wq"] + p["bq"]).reshape(N, S, H, Dh).transpose(0, 2, 1, 3)
    k = (xkv @ p["wk"] + p["bk"]).reshape(N, T, H, Dh).transpose(0, 2, 1, 3)
    v = (xkv @ p["wv"] + p["bv"]).reshape(N, T, H, Dh).transpose(0, 2, 1, 3)
    s = jnp.einsum("nhsd,nhtd->nhst", q, k) / math.sqrt(D)   # scale by sqrt(embed_dim) like torch ref
    if mask is not None:
        s = s + (-1e10) * (1.0 - mask)
    a = jax.nn.softmax(s, axis=-1)
    y = jnp.einsum("nhst,nhtd->nhsd", a, v).transpose(0, 2, 1, 3).reshape(N, S, D)
    return y @ p["wo"] + p["bo"]


def _ref_ln(x, g, b):
    m = jnp.mean(x, axis=-1, keepdims=True)
    v = jnp.mean((x - m) ** 2, axis=-1, keepdims=True)
    return (x - m) / jnp.sqrt(v + 1e-5) * g + b


def ref_decoder_layer(params, seq, cond, mask, *, num_heads):
    sa, ca = params["self_attn"], params["cross_attn"]
    x = _ref_ln(seq + _ref_mha(seq, seq, sa, mask, num_heads), sa["ln_g"], sa["ln_b"])
    x = _ref_ln(x + _ref_mha(x, cond, ca, None, num_heads), ca["ln_g"], ca["ln_b"])
    h = jnp.maximum(x @ params["ffn_w1"] + params["ffn_b1"], 0.0) @ params["ffn_w2"] + params["ffn_b2"]
    return _ref_ln(x + h, params["ffn_ln_g"], params["ffn_ln_b"])


# ----------------------------- parameter init -----------------------------

def init_params(key, *, embed_dim, dim_feedforward):
    keys = iter(jax.random.split(key, 32))

    def normal(shape):
        return 0.02 * jax.random.normal(next(keys), shape, jnp.float32)

    def zeros(shape):
        return jnp.zeros(shape, jnp.float32)

    def attn():
        return dict(
            wq=normal((embed_dim, embed_dim)), bq=zeros((embed_dim,)),
            wk=normal((embed_dim, embed_dim)), bk=zeros((embed_dim,)),
            wv=normal((embed_dim, embed_dim)), bv=zeros((embed_dim,)),
            wo=normal((embed_dim, embed_dim)), bo=zeros((embed_dim,)),
            ln_g=jnp.ones((embed_dim,), jnp.float32), ln_b=zeros((embed_dim,)),
        )

    return dict(
        self_attn=attn(), cross_attn=attn(),
        ffn_w1=normal((embed_dim, dim_feedforward)), ffn_b1=zeros((dim_feedforward,)),
        ffn_w2=normal((dim_feedforward, embed_dim)), ffn_b2=zeros((embed_dim,)),
        ffn_ln_g=jnp.ones((embed_dim,), jnp.float32), ffn_ln_b=zeros((embed_dim,)),
    )


# ----------------------------- main -----------------------------

if __name__ == "__main__":
    # Small shapes consistent with the module
    N, S, T = 2, 8, 4                    # batch, target seq, condition seq
    embed_dim, num_heads = 32, 4
    dim_feedforward = 2048               # DecoderLayer default

    key = jax.random.PRNGKey(0)
    k_p, k_seq, k_cond = jax.random.split(key, 3)
    params = init_params(k_p, embed_dim=embed_dim, dim_feedforward=dim_feedforward)
    seq = jax.random.normal(k_seq, (N, S, embed_dim), jnp.float32)
    cond = jax.random.normal(k_cond, (N, T, embed_dim), jnp.float32)
    mask = jnp.tril(jnp.ones((S, S), jnp.float32))   # causal self-attention mask

    # f32 MXU path (exact semantics) ------------------------------------------------
    out = decoder_layer_forward(params, seq, cond, mask,
                                num_heads=num_heads, compute_dtype=jnp.float32)
    out = jax.block_until_ready(out)
    assert out.shape == (N, S, embed_dim), out.shape

    expected = jax.block_until_ready(
        ref_decoder_layer(params, seq, cond, mask, num_heads=num_heads))
    max_err = float(jnp.max(jnp.abs(out - expected)))
    assert jnp.allclose(out, expected, atol=2e-3, rtol=2e-3), max_err

    # bf16 MXU path (perf review: bf16 matmuls, f32 softmax/LN) — loose sanity check
    out_bf16 = jax.block_until_ready(
        decoder_layer_forward(params, seq, cond, mask,
                              num_heads=num_heads, compute_dtype=jnp.bfloat16))
    assert float(jnp.max(jnp.abs(out_bf16 - expected))) < 0.25

    print("KERNEL_OK")
</pallas_src>

<mosaic_0001>
module attributes {stable_mosaic.version = 11 : i64} {
  func.func @self_attn_block_kernel(%arg0: i32, %arg1: memref<1x8x32xf32, #tpu.memory_space<vmem>>, %arg2: memref<32x96xf32, #tpu.memory_space<vmem>>, %arg3: memref<1x96xf32, #tpu.memory_space<vmem>>, %arg4: memref<32x32xf32, #tpu.memory_space<vmem>>, %arg5: memref<1x32xf32, #tpu.memory_space<vmem>>, %arg6: memref<1x32xf32, #tpu.memory_space<vmem>>, %arg7: memref<1x32xf32, #tpu.memory_space<vmem>>, %arg8: memref<8x8xf32, #tpu.memory_space<vmem>>, %arg9: memref<1x8x32xf32, #tpu.memory_space<vmem>>) attributes {dimension_semantics = [#tpu.dimension_semantics<parallel>], iteration_bounds = array<i64: 2>, scalar_prefetch = 0 : i64, scratch_operands = 0 : i64, tpu.core_type = #tpu.core_type<tc>, window_params = [{transform_indices = @transform_0, window_bounds = array<i64: 1, 8, 32>}, {pipeline_mode = #tpu.pipeline_mode<synchronous>, transform_indices = @transform_1, window_bounds = array<i64: 32, 96>}, {pipeline_mode = #tpu.pipeline_mode<synchronous>, transform_indices = @transform_2, window_bounds = array<i64: 1, 96>}, {pipeline_mode = #tpu.pipeline_mode<synchronous>, transform_indices = @transform_3, window_bounds = array<i64: 32, 32>}, {pipeline_mode = #tpu.pipeline_mode<synchronous>, transform_indices = @transform_4, window_bounds = array<i64: 1, 32>}, {pipeline_mode = #tpu.pipeline_mode<synchronous>, transform_indices = @transform_5, window_bounds = array<i64: 1, 32>}, {pipeline_mode = #tpu.pipeline_mode<synchronous>, transform_indices = @transform_6, window_bounds = array<i64: 1, 32>}, {pipeline_mode = #tpu.pipeline_mode<synchronous>, transform_indices = @transform_7, window_bounds = array<i64: 8, 8>}, {transform_indices = @transform_8, window_bounds = array<i64: 1, 8, 32>}]} {
    %c0 = arith.constant 0 : index
    %c0_0 = arith.constant 0 : index
    %c0_1 = arith.constant 0 : index
    %0 = vector.load %arg1[%c0, %c0_0, %c0_1] : memref<1x8x32xf32, #tpu.memory_space<vmem>>, vector<1x8x32xf32>
    %1 = vector.shape_cast %0 : vector<1x8x32xf32> to vector<8x32xf32>
    %c0_2 = arith.constant 0 : index
    %c0_3 = arith.constant 0 : index
    %2 = vector.load %arg2[%c0_2, %c0_3] : memref<32x96xf32, #tpu.memory_space<vmem>>, vector<32x96xf32>
    %cst = arith.constant dense<0.000000e+00> : vector<8x96xf32>
    %3 = tpu.matmul %1, %2, %cst {dimension_numbers = #tpu.dot_dimension_numbers<[1], [0], [0], [1], [0, 0, 1, 1], [], []>} : vector<8x32xf32>, vector<32x96xf32>, vector<8x96xf32> -> vector<8x96xf32>
    %c0_4 = arith.constant 0 : index
    %c0_5 = arith.constant 0 : index
    %4 = vector.load %arg3[%c0_4, %c0_5] : memref<1x96xf32, #tpu.memory_space<vmem>>, vector<1x96xf32>
    %5 = vector.broadcast %4 : vector<1x96xf32> to vector<8x96xf32>
    %6 = arith.addf %3, %5 : vector<8x96xf32>
    %7 = vector.extract_strided_slice %6 {offsets = [0, 0], sizes = [8, 32], strides = [1, 1]} : vector<8x96xf32> to vector<8x32xf32>
    %8 = vector.extract_strided_slice %6 {offsets = [0, 32], sizes = [8, 32], strides = [1, 1]} : vector<8x96xf32> to vector<8x32xf32>
    %9 = vector.extract_strided_slice %6 {offsets = [0, 64], sizes = [8, 32], strides = [1, 1]} : vector<8x96xf32> to vector<8x32xf32>
    %c0_6 = arith.constant 0 : index
    %c0_7 = arith.constant 0 : index
    %10 = vector.load %arg4[%c0_6, %c0_7] : memref<32x32xf32, #tpu.memory_space<vmem>>, vector<32x32xf32>
    %c0_8 = arith.constant 0 : index
    %c0_9 = arith.constant 0 : index
    %11 = vector.load %arg5[%c0_8, %c0_9] : memref<1x32xf32, #tpu.memory_space<vmem>>, vector<1x32xf32>
    %c0_10 = arith.constant 0 : index
    %c0_11 = arith.constant 0 : index
    %12 = vector.load %arg6[%c0_10, %c0_11] : memref<1x32xf32, #tpu.memory_space<vmem>>, vector<1x32xf32>
    %c0_12 = arith.constant 0 : index
    %c0_13 = arith.constant 0 : index
    %13 = vector.load %arg7[%c0_12, %c0_13] : memref<1x32xf32, #tpu.memory_space<vmem>>, vector<1x32xf32>
    %c0_14 = arith.constant 0 : index
    %c0_15 = arith.constant 0 : index
    %14 = vector.load %arg8[%c0_14, %c0_15] : memref<8x8xf32, #tpu.memory_space<vmem>>, vector<8x8xf32>
    %cst_16 = arith.constant 0.000000e+00 : f32
    %15 = vector.broadcast %cst_16 : f32 to vector<8x32xf32>
    %16 = vector.extract_strided_slice %7 {offsets = [0, 0], sizes = [8, 8], strides = [1, 1]} : vector<8x32xf32> to vector<8x8xf32>
    %17 = vector.extract_strided_slice %8 {offsets = [0, 0], sizes = [8, 8], strides = [1, 1]} : vector<8x32xf32> to vector<8x8xf32>
    %18 = vector.extract_strided_slice %9 {offsets = [0, 0], sizes = [8, 8], strides = [1, 1]} : vector<8x32xf32> to vector<8x8xf32>
    %cst_17 = arith.constant dense<0.000000e+00> : vector<8x8xf32>
    %19 = tpu.matmul %16, %17, %cst_17 {dimension_numbers = #tpu.dot_dimension_numbers<[1], [1], [0], [0], [0, 0, 1, 0], [], []>} : vector<8x8xf32>, vector<8x8xf32>, vector<8x8xf32> -> vector<8x8xf32>
    %cst_18 = arith.constant 0.176776692 : f32
    %20 = vector.broadcast %cst_18 : f32 to vector<8x8xf32>
    %21 = arith.mulf %19, %20 : vector<8x8xf32>
    %22 = arith.addf %21, %14 : vector<8x8xf32>
    %cst_19 = arith.constant dense<0xFF800000> : vector<8xf32>
    %23 = vector.multi_reduction <maximumf>, %22, %cst_19 [1] : vector<8x8xf32> to vector<8xf32>
    %24 = vector.shape_cast %23 : vector<8xf32> to vector<8x1xf32>
    %25 = vector.broadcast %24 : vector<8x1xf32> to vector<8x8xf32>
    %26 = arith.subf %22, %25 : vector<8x8xf32>
    %27 = math.exp %26 : vector<8x8xf32>
    %cst_20 = arith.constant dense<0.000000e+00> : vector<8xf32>
    %28 = vector.multi_reduction <add>, %27, %cst_20 [1] : vector<8x8xf32> to vector<8xf32>
    %29 = vector.shape_cast %28 : vector<8xf32> to vector<8x1xf32>
    %30 = tpu.reciprocal %29 {approx = true} : vector<8x1xf32> -> vector<8x1xf32>
    %31 = vector.broadcast %30 : vector<8x1xf32> to vector<8x8xf32>
    %32 = arith.mulf %27, %31 : vector<8x8xf32>
    %cst_21 = arith.constant dense<0.000000e+00> : vector<8x8xf32>
    %33 = tpu.matmul %32, %18, %cst_21 {dimension_numbers = #tpu.dot_dimension_numbers<[1], [0], [0], [1], [0, 0, 1, 1], [], []>} : vector<8x8xf32>, vector<8x8xf32>, vector<8x8xf32> -> vector<8x8xf32>
    %34 = vector.extract_strided_slice %10 {offsets = [0, 0], sizes = [8, 32], strides = [1, 1]} : vector<32x32xf32> to vector<8x32xf32>
    %cst_22 = arith.constant dense<0.000000e+00> : vector<8x32xf32>
    %35 = tpu.matmul %33, %34, %cst_22 {dimension_numbers = #tpu.dot_dimension_numbers<[1], [0], [0], [1], [0, 0, 1, 1], [], []>} : vector<8x8xf32>, vector<8x32xf32>, vector<8x32xf32> -> vector<8x32xf32>
    %36 = arith.addf %15, %35 : vector<8x32xf32>
    %37 = vector.extract_strided_slice %7 {offsets = [0, 8], sizes = [8, 8], strides = [1, 1]} : vector<8x32xf32> to vector<8x8xf32>
    %38 = vector.extract_strided_slice %8 {offsets = [0, 8], sizes = [8, 8], strides = [1, 1]} : vector<8x32xf32> to vector<8x8xf32>
    %39 = vector.extract_strided_slice %9 {offsets = [0, 8], sizes = [8, 8], strides = [1, 1]} : vector<8x32xf32> to vector<8x8xf32>
    %cst_23 = arith.constant dense<0.000000e+00> : vector<8x8xf32>
    %40 = tpu.matmul %37, %38, %cst_23 {dimension_numbers = #tpu.dot_dimension_numbers<[1], [1], [0], [0], [0, 0, 1, 0], [], []>} : vector<8x8xf32>, vector<8x8xf32>, vector<8x8xf32> -> vector<8x8xf32>
    %cst_24 = arith.constant 0.176776692 : f32
    %41 = vector.broadcast %cst_24 : f32 to vector<8x8xf32>
    %42 = arith.mulf %40, %41 : vector<8x8xf32>
    %43 = arith.addf %42, %14 : vector<8x8xf32>
    %cst_25 = arith.constant dense<0xFF800000> : vector<8xf32>
    %44 = vector.multi_reduction <maximumf>, %43, %cst_25 [1] : vector<8x8xf32> to vector<8xf32>
    %45 = vector.shape_cast %44 : vector<8xf32> to vector<8x1xf32>
    %46 = vector.broadcast %45 : vector<8x1xf32> to vector<8x8xf32>
    %47 = arith.subf %43, %46 : vector<8x8xf32>
    %48 = math.exp %47 : vector<8x8xf32>
    %cst_26 = arith.constant dense<0.000000e+00> : vector<8xf32>
    %49 = vector.multi_reduction <add>, %48, %cst_26 [1] : vector<8x8xf32> to vector<8xf32>
    %50 = vector.shape_cast %49 : vector<8xf32> to vector<8x1xf32>
    %51 = tpu.reciprocal %50 {approx = true} : vector<8x1xf32> -> vector<8x1xf32>
    %52 = vector.broadcast %51 : vector<8x1xf32> to vector<8x8xf32>
    %53 = arith.mulf %48, %52 : vector<8x8xf32>
    %cst_27 = arith.constant dense<0.000000e+00> : vector<8x8xf32>
    %54 = tpu.matmul %53, %39, %cst_27 {dimension_numbers = #tpu.dot_dimension_numbers<[1], [0], [0], [1], [0, 0, 1, 1], [], []>} : vector<8x8xf32>, vector<8x8xf32>, vector<8x8xf32> -> vector<8x8xf32>
    %55 = vector.extract_strided_slice %10 {offsets = [8, 0], sizes = [8, 32], strides = [1, 1]} : vector<32x32xf32> to vector<8x32xf32>
    %cst_28 = arith.constant dense<0.000000e+00> : vector<8x32xf32>
    %56 = tpu.matmul %54, %55, %cst_28 {dimension_numbers = #tpu.dot_dimension_numbers<[1], [0], [0], [1], [0, 0, 1, 1], [], []>} : vector<8x8xf32>, vector<8x32xf32>, vector<8x32xf32> -> vector<8x32xf32>
    %57 = arith.addf %36, %56 : vector<8x32xf32>
    %58 = vector.extract_strided_slice %7 {offsets = [0, 16], sizes = [8, 8], strides = [1, 1]} : vector<8x32xf32> to vector<8x8xf32>
    %59 = vector.extract_strided_slice %8 {offsets = [0, 16], sizes = [8, 8], strides = [1, 1]} : vector<8x32xf32> to vector<8x8xf32>
    %60 = vector.extract_strided_slice %9 {offsets = [0, 16], sizes = [8, 8], strides = [1, 1]} : vector<8x32xf32> to vector<8x8xf32>
    %cst_29 = arith.constant dense<0.000000e+00> : vector<8x8xf32>
    %61 = tpu.matmul %58, %59, %cst_29 {dimension_numbers = #tpu.dot_dimension_numbers<[1], [1], [0], [0], [0, 0, 1, 0], [], []>} : vector<8x8xf32>, vector<8x8xf32>, vector<8x8xf32> -> vector<8x8xf32>
    %cst_30 = arith.constant 0.176776692 : f32
    %62 = vector.broadcast %cst_30 : f32 to vector<8x8xf32>
    %63 = arith.mulf %61, %62 : vector<8x8xf32>
    %64 = arith.addf %63, %14 : vector<8x8xf32>
    %cst_31 = arith.constant dense<0xFF800000> : vector<8xf32>
    %65 = vector.multi_reduction <maximumf>, %64, %cst_31 [1] : vector<8x8xf32> to vector<8xf32>
    %66 = vector.shape_cast %65 : vector<8xf32> to vector<8x1xf32>
    %67 = vector.broadcast %66 : vector<8x1xf32> to vector<8x8xf32>
    %68 = arith.subf %64, %67 : vector<8x8xf32>
    %69 = math.exp %68 : vector<8x8xf32>
    %cst_32 = arith.constant dense<0.000000e+00> : vector<8xf32>
    %70 = vector.multi_reduction <add>, %69, %cst_32 [1] : vector<8x8xf32> to vector<8xf32>
    %71 = vector.shape_cast %70 : vector<8xf32> to vector<8x1xf32>
    %72 = tpu.reciprocal %71 {approx = true} : vector<8x1xf32> -> vector<8x1xf32>
    %73 = vector.broadcast %72 : vector<8x1xf32> to vector<8x8xf32>
    %74 = arith.mulf %69, %73 : vector<8x8xf32>
    %cst_33 = arith.constant dense<0.000000e+00> : vector<8x8xf32>
    %75 = tpu.matmul %74, %60, %cst_33 {dimension_numbers = #tpu.dot_dimension_numbers<[1], [0], [0], [1], [0, 0, 1, 1], [], []>} : vector<8x8xf32>, vector<8x8xf32>, vector<8x8xf32> -> vector<8x8xf32>
    %76 = vector.extract_strided_slice %10 {offsets = [16, 0], sizes = [8, 32], strides = [1, 1]} : vector<32x32xf32> to vector<8x32xf32>
    %cst_34 = arith.constant dense<0.000000e+00> : vector<8x32xf32>
    %77 = tpu.matmul %75, %76, %cst_34 {dimension_numbers = #tpu.dot_dimension_numbers<[1], [0], [0], [1], [0, 0, 1, 1], [], []>} : vector<8x8xf32>, vector<8x32xf32>, vector<8x32xf32> -> vector<8x32xf32>
    %78 = arith.addf %57, %77 : vector<8x32xf32>
    %79 = vector.extract_strided_slice %7 {offsets = [0, 24], sizes = [8, 8], strides = [1, 1]} : vector<8x32xf32> to vector<8x8xf32>
    %80 = vector.extract_strided_slice %8 {offsets = [0, 24], sizes = [8, 8], strides = [1, 1]} : vector<8x32xf32> to vector<8x8xf32>
    %81 = vector.extract_strided_slice %9 {offsets = [0, 24], sizes = [8, 8], strides = [1, 1]} : vector<8x32xf32> to vector<8x8xf32>
    %cst_35 = arith.constant dense<0.000000e+00> : vector<8x8xf32>
    %82 = tpu.matmul %79, %80, %cst_35 {dimension_numbers = #tpu.dot_dimension_numbers<[1], [1], [0], [0], [0, 0, 1, 0], [], []>} : vector<8x8xf32>, vector<8x8xf32>, vector<8x8xf32> -> vector<8x8xf32>
    %cst_36 = arith.constant 0.176776692 : f32
    %83 = vector.broadcast %cst_36 : f32 to vector<8x8xf32>
    %84 = arith.mulf %82, %83 : vector<8x8xf32>
    %85 = arith.addf %84, %14 : vector<8x8xf32>
    %cst_37 = arith.constant dense<0xFF800000> : vector<8xf32>
    %86 = vector.multi_reduction <maximumf>, %85, %cst_37 [1] : vector<8x8xf32> to vector<8xf32>
    %87 = vector.shape_cast %86 : vector<8xf32> to vector<8x1xf32>
    %88 = vector.broadcast %87 : vector<8x1xf32> to vector<8x8xf32>
    %89 = arith.subf %85, %88 : vector<8x8xf32>
    %90 = math.exp %89 : vector<8x8xf32>
    %cst_38 = arith.constant dense<0.000000e+00> : vector<8xf32>
    %91 = vector.multi_reduction <add>, %90, %cst_38 [1] : vector<8x8xf32> to vector<8xf32>
    %92 = vector.shape_cast %91 : vector<8xf32> to vector<8x1xf32>
    %93 = tpu.reciprocal %92 {approx = true} : vector<8x1xf32> -> vector<8x1xf32>
    %94 = vector.broadcast %93 : vector<8x1xf32> to vector<8x8xf32>
    %95 = arith.mulf %90, %94 : vector<8x8xf32>
    %cst_39 = arith.constant dense<0.000000e+00> : vector<8x8xf32>
    %96 = tpu.matmul %95, %81, %cst_39 {dimension_numbers = #tpu.dot_dimension_numbers<[1], [0], [0], [1], [0, 0, 1, 1], [], []>} : vector<8x8xf32>, vector<8x8xf32>, vector<8x8xf32> -> vector<8x8xf32>
    %97 = vector.extract_strided_slice %10 {offsets = [24, 0], sizes = [8, 32], strides = [1, 1]} : vector<32x32xf32> to vector<8x32xf32>
    %cst_40 = arith.constant dense<0.000000e+00> : vector<8x32xf32>
    %98 = tpu.matmul %96, %97, %cst_40 {dimension_numbers = #tpu.dot_dimension_numbers<[1], [0], [0], [1], [0, 0, 1, 1], [], []>} : vector<8x8xf32>, vector<8x32xf32>, vector<8x32xf32> -> vector<8x32xf32>
    %99 = arith.addf %78, %98 : vector<8x32xf32>
    %100 = vector.broadcast %11 : vector<1x32xf32> to vector<8x32xf32>
    %101 = arith.addf %99, %100 : vector<8x32xf32>
    %102 = arith.addf %1, %101 : vector<8x32xf32>
    %cst_41 = arith.constant dense<0.000000e+00> : vector<8xf32>
    %103 = vector.multi_reduction <add>, %102, %cst_41 [1] : vector<8x32xf32> to vector<8xf32>
    %104 = vector.shape_cast %103 : vector<8xf32> to vector<8x1xf32>
    %cst_42 = arith.constant 3.200000e+01 : f32
    %105 = vector.broadcast %cst_42 : f32 to vector<8x1xf32>
    %106 = arith.divf %104, %105 : vector<8x1xf32>
    %107 = vector.broadcast %106 : vector<8x1xf32> to vector<8x32xf32>
    %108 = arith.subf %102, %107 : vector<8x32xf32>
    %109 = arith.mulf %108, %108 : vector<8x32xf32>
    %cst_43 = arith.constant dense<0.000000e+00> : vector<8xf32>
    %110 = vector.multi_reduction <add>, %109, %cst_43 [1] : vector<8x32xf32> to vector<8xf32>
    %111 = vector.shape_cast %110 : vector<8xf32> to vector<8x1xf32>
    %cst_44 = arith.constant 3.200000e+01 : f32
    %112 = vector.broadcast %cst_44 : f32 to vector<8x1xf32>
    %113 = arith.divf %111, %112 : vector<8x1xf32>
    %114 = vector.broadcast %106 : vector<8x1xf32> to vector<8x32xf32>
    %115 = arith.subf %102, %114 : vector<8x32xf32>
    %cst_45 = arith.constant 9.99999974E-6 : f32
    %116 = vector.broadcast %cst_45 : f32 to vector<8x1xf32>
    %117 = arith.addf %113, %116 : vector<8x1xf32>
    %118 = math.rsqrt %117 : vector<8x1xf32>
    %119 = vector.broadcast %118 : vector<8x1xf32> to vector<8x32xf32>
    %120 = arith.mulf %115, %119 : vector<8x32xf32>
    %121 = vector.broadcast %12 : vector<1x32xf32> to vector<8x32xf32>
    %122 = arith.mulf %120, %121 : vector<8x32xf32>
    %123 = vector.broadcast %13 : vector<1x32xf32> to vector<8x32xf32>
    %124 = arith.addf %122, %123 : vector<8x32xf32>
    %c0_46 = arith.constant 0 : index
    %c0_47 = arith.constant 0 : index
    %c0_48 = arith.constant 0 : index
    %125 = vector.load %arg9[%c0_46, %c0_47, %c0_48] : memref<1x8x32xf32, #tpu.memory_space<vmem>>, vector<1x8x32xf32>
    %126 = vector.shape_cast %125 : vector<1x8x32xf32> to vector<8x32xf32>
    %127 = vector.shape_cast %124 : vector<8x32xf32> to vector<1x8x32xf32>
    tpu.vector_store %arg9[%c0_46, %c0_47, %c0_48], %127 {strides = array<i32>} : memref<1x8x32xf32, #tpu.memory_space<vmem>>, vector<1x8x32xf32>,
    return
  }
  func.func @transform_0(%arg0: i32) -> (i32, i32, i32) {
    %c0_i32 = arith.constant 0 : i32
    %c0_i32_0 = arith.constant 0 : i32
    %c0_i32_1 = arith.constant 0 : i32
    return %arg0, %c0_i32, %c0_i32_0 : i32, i32, i32
  }
  func.func @transform_1(%arg0: i32) -> (i32, i32) {
    %c0_i32 = arith.constant 0 : i32
    %c0_i32_0 = arith.constant 0 : i32
    %c0_i32_1 = arith.constant 0 : i32
    return %c0_i32, %c0_i32_0 : i32, i32
  }
  func.func @transform_2(%arg0: i32) -> (i32, i32) {
    %c0_i32 = arith.constant 0 : i32
    %c0_i32_0 = arith.constant 0 : i32
    %c0_i32_1 = arith.constant 0 : i32
    return %c0_i32, %c0_i32_0 : i32, i32
  }
  func.func @transform_3(%arg0: i32) -> (i32, i32) {
    %c0_i32 = arith.constant 0 : i32
    %c0_i32_0 = arith.constant 0 : i32
    %c0_i32_1 = arith.constant 0 : i32
    return %c0_i32, %c0_i32_0 : i32, i32
  }
  func.func @transform_4(%arg0: i32) -> (i32, i32) {
    %c0_i32 = arith.constant 0 : i32
    %c0_i32_0 = arith.constant 0 : i32
    %c0_i32_1 = arith.constant 0 : i32
    return %c0_i32, %c0_i32_0 : i32, i32
  }
  func.func @transform_5(%arg0: i32) -> (i32, i32) {
    %c0_i32 = arith.constant 0 : i32
    %c0_i32_0 = arith.constant 0 : i32
    %c0_i32_1 = arith.constant 0 : i32
    return %c0_i32, %c0_i32_0 : i32, i32
  }
  func.func @transform_6(%arg0: i32) -> (i32, i32) {
    %c0_i32 = arith.constant 0 : i32
    %c0_i32_0 = arith.constant 0 : i32
    %c0_i32_1 = arith.constant 0 : i32
    return %c0_i32, %c0_i32_0 : i32, i32
  }
  func.func @transform_7(%arg0: i32) -> (i32, i32) {
    %c0_i32 = arith.constant 0 : i32
    %c0_i32_0 = arith.constant 0 : i32
    %c0_i32_1 = arith.constant 0 : i32
    return %c0_i32, %c0_i32_0 : i32, i32
  }
  func.func @transform_8(%arg0: i32) -> (i32, i32, i32) {
    %c0_i32 = arith.constant 0 : i32
    %c0_i32_0 = arith.constant 0 : i32
    %c0_i32_1 = arith.constant 0 : i32
    return %arg0, %c0_i32, %c0_i32_0 : i32, i32, i32
  }
}

</mosaic_0001>

<llo_original>
// kernel: tpu_custom_call.1
$region0: #{tpu_custom_call.1}
  #allocation0 [shape = 'u32[]', space=smem, size = 0x4, offset = 0x4, fixed_abs, tag = 'smem constant byte address 0x4 - core index']
  #allocation1 [shape = 'u32[144,128]{1,0:T(1,128)}', space=vmem, size = 0x12000, scoped, tag = 'internal scratch']
  %s0 = inlined_call_operand.hbm [shape: f32[2,8,32], index: 0, kind: input, shape index: {}]
  %s1 = inlined_call_operand.hbm [shape: f32[32,96], index: 1, kind: input, shape index: {}]
  %s2 = inlined_call_operand.vmem [shape: f32[1,96], index: 2, kind: input, shape index: {}]
  %s3 = inlined_call_operand.hbm [shape: f32[32,32], index: 3, kind: input, shape index: {}]
  %s4 = inlined_call_operand.vmem [shape: f32[1,32], index: 4, kind: input, shape index: {}]
  %s5 = inlined_call_operand.vmem [shape: f32[1,32], index: 5, kind: input, shape index: {}]
  %s6 = inlined_call_operand.vmem [shape: f32[1,32], index: 6, kind: input, shape index: {}]
  %s7 = inlined_call_operand.vmem [shape: f32[8,8], index: 7, kind: input, shape index: {}]
  %s8 = inlined_call_operand.hbm [shape: f32[2,8,32], index: 8, kind: output, shape index: {}]
  %s9 = sld [smem:[#allocation0]]
  $region77: #{tpu_custom_call.1} parent=0
    _
  %s11 = ssub.s32 1, %s9
  %s12 = scalar_select 0, %s11, %s9
  $region1: #{tpu_custom_call.1} parent=0
    #allocation2 [shape = 'u8[8192]{0}', space=vmem, size = 0x2000, scoped, tag = 'input window, operand 0']
    #allocation3 [shape = 's32[2]{0}', space=sflag, size = 0x8, scoped, tag = 'scoped memory for tpu_custom_call.1']
    #allocation4 [shape = 's32[2]{0}', space=sflag, size = 0x8, scoped, tag = 'scoped memory for tpu_custom_call.1']
    #allocation5 [shape = 'u8[16384]{0}', space=vmem, size = 0x4000, scoped, tag = 'input window, operand 1, single buffered']
    #allocation6 [shape = 's32[1]{0}', space=sflag, size = 0x4, scoped, tag = 'scoped memory for tpu_custom_call.1']
    #allocation7 [shape = 'u8[16384]{0}', space=vmem, size = 0x4000, scoped, tag = 'input window, operand 3, single buffered']
    #allocation8 [shape = 'u8[8192]{0}', space=vmem, size = 0x2000, scoped, tag = 'output window, operand 0']
    %13 = vsyncpa [#allocation3], 0
    %s14 = scalar_lea.sflag [#allocation3], 1
    %15 = vsyncpa %s14, 0
    %16 = vsyncpa [#allocation6], 0
    %17 = vsyncpa [#allocation4], 0
    %s18 = scalar_lea.sflag [#allocation4], 1
    %19 = vsyncpa %s18, 0
    loop: start=0, step=1, limit=4
    $region2: #{tpu_custom_call.1} parent=1 // loop_pre_header
      _
    $region3: #{tpu_custom_call.1} parent=1 // loop_header
      %s21 = sphi 0, %s25
      %p22 = scmp.ge.s32.totalorder %s21, 4
      %s31 = sphi 0, %s33
      %s34 = sphi 0, %s31
      %s35 = sphi 0, %s34
      %s51 = sphi 0, %s35
      %s55 = sphi 0, %s55
      %s57 = sphi 0, %s55
      %s58 = sphi 0, %s57
      %s72 = sphi 0, %s58
      %s76 = sphi 0, %s76
      %s78 = sphi 0, %s76
      %s79 = sphi 0, %s78
      %s93 = sphi 0, %s79
      %s97 = sphi 0, %s97
      %s99 = sphi 0, %s97
      %s100 = sphi 0, %s99
      %s114 = sphi 0, %s100
      %s118 = sphi 0, %s118
      %s120 = sphi 0, %s118
      %s121 = sphi 0, %s120
      %s135 = sphi 0, %s121
      %s139 = sphi 0, %s139
      %s141 = sphi 0, %s139
      %s142 = sphi 0, %s141
      %s156 = sphi 0, %s142
      %s160 = sphi 0, %s160
      %s162 = sphi 0, %s160
      %s163 = sphi 0, %s162
      %s177 = sphi 0, %s163
      %s181 = sphi 0, %s181
      %s183 = sphi 0, %s181
      %s184 = sphi 0, %s183
      %s198 = sphi 0, %s184
      %s204 = sphi 0, %s206
      %s207 = sphi 0, %s204
      %s208 = sphi 0, %s207
      %s224 = sphi 0, %s208
    $region4: #{tpu_custom_call.1} parent=1 // loop_header_branch
      %24 = sbr.rel (%p22) target = $region8
    $region5: #{tpu_custom_call.1} parent=1 // loop_body
      %s26 = ssub.s32 %s21, 1
      %s27 = ssub.s32 %s21, 2
      %s28 = sadd.s32 %s21, 1
      %s29 = ssub.s32 %s21, %s28
      %p30 = scmp.eq.s32.totalorder %s29, 0
      %s32 = sadd.s32 %s31, 1
      %s33 = scalar_select %p30, %s31, %s32
      %p36 = pneg %p30
      %p37 = scmp.eq.s32.totalorder %s21, 1
      %p38 = por %p36, %p37
      %p39 = scmp.ne.s32.totalorder %s31, %s34
      %p40 = scmp.eq.s32.totalorder %s21, 0
      %p41 = por %p39, %p40
      %p42 = scmp.ne.s32.totalorder %s31, %s34
      %p43 = scmp.eq.s32.totalorder %s26, 1
      %p44 = por %p42, %p43
      %p45 = scmp.ne.s32.totalorder %s34, %s35
      %p46 = scmp.eq.s32.totalorder %s26, 0
      %p47 = por %p45, %p46
      %p48 = scmp.ne.s32.totalorder %s34, %s35
      %p49 = scmp.eq.s32.totalorder %s27, 1
      %p50 = por %p48, %p49
      %p52 = scmp.ne.s32.totalorder %s35, %s51
      %p53 = scmp.eq.s32.totalorder %s27, 0
      %p54 = por %p52, %p53
      %s56 = sadd.s32 %s55, 1
      %p59 = scmp.eq.s32.totalorder %s21, 1
      %p60 = scmp.ne.s32.totalorder %s55, %s57
      %p61 = scmp.eq.s32.totalorder %s21, 0
      %p62 = por %p60, %p61
      %p63 = scmp.ne.s32.totalorder %s55, %s57
      %p64 = scmp.eq.s32.totalorder %s26, 1
      %p65 = por %p63, %p64
      %p66 = scmp.ne.s32.totalorder %s57, %s58
      %p67 = scmp.eq.s32.totalorder %s26, 0
      %p68 = por %p66, %p67
      %p69 = scmp.ne.s32.totalorder %s57, %s58
      %p70 = scmp.eq.s32.totalorder %s27, 1
      %p71 = por %p69, %p70
      %p73 = scmp.ne.s32.totalorder %s58, %s72
      %p74 = scmp.eq.s32.totalorder %s27, 0
      %p75 = por %p73, %p74
      %s77 = sadd.s32 %s76, 1
      %p80 = scmp.eq.s32.totalorder %s21, 1
      %p81 = scmp.ne.s32.totalorder %s76, %s78
      %p82 = scmp.eq.s32.totalorder %s21, 0
      %p83 = por %p81, %p82
      %p84 = scmp.ne.s32.totalorder %s76, %s78
      %p85 = scmp.eq.s32.totalorder %s26, 1
      %p86 = por %p84, %p85
      %p87 = scmp.ne.s32.totalorder %s78, %s79
      %p88 = scmp.eq.s32.totalorder %s26, 0
      %p89 = por %p87, %p88
      %p90 = scmp.ne.s32.totalorder %s78, %s79
      %p91 = scmp.eq.s32.totalorder %s27, 1
      %p92 = por %p90, %p91
      %p94 = scmp.ne.s32.totalorder %s79, %s93
      %p95 = scmp.eq.s32.totalorder %s27, 0
      %p96 = por %p94, %p95
      %s98 = sadd.s32 %s97, 1
      %p101 = scmp.eq.s32.totalorder %s21, 1
      %p102 = scmp.ne.s32.totalorder %s97, %s99
      %p103 = scmp.eq.s32.totalorder %s21, 0
      %p104 = por %p102, %p103
      %p105 = scmp.ne.s32.totalorder %s97, %s99
      %p106 = scmp.eq.s32.totalorder %s26, 1
      %p107 = por %p105, %p106
      %p108 = scmp.ne.s32.totalorder %s99, %s100
      %p109 = scmp.eq.s32.totalorder %s26, 0
      %p110 = por %p108, %p109
      %p111 = scmp.ne.s32.totalorder %s99, %s100
      %p112 = scmp.eq.s32.totalorder %s27, 1
      %p113 = por %p111, %p112
      %p115 = scmp.ne.s32.totalorder %s100, %s114
      %p116 = scmp.eq.s32.totalorder %s27, 0
      %p117 = por %p115, %p116
      %s119 = sadd.s32 %s118, 1
      %p122 = scmp.eq.s32.totalorder %s21, 1
      %p123 = scmp.ne.s32.totalorder %s118, %s120
      %p124 = scmp.eq.s32.totalorder %s21, 0
      %p125 = por %p123, %p124
      %p126 = scmp.ne.s32.totalorder %s118, %s120
      %p127 = scmp.eq.s32.totalorder %s26, 1
      %p128 = por %p126, %p127
      %p129 = scmp.ne.s32.totalorder %s120, %s121
      %p130 = scmp.eq.s32.totalorder %s26, 0
      %p131 = por %p129, %p130
      %p132 = scmp.ne.s32.totalorder %s120, %s121
      %p133 = scmp.eq.s32.totalorder %s27, 1
      %p134 = por %p132, %p133
      %p136 = scmp.ne.s32.totalorder %s121, %s135
      %p137 = scmp.eq.s32.totalorder %s27, 0
      %p138 = por %p136, %p137
      %s140 = sadd.s32 %s139, 1
      %p143 = scmp.eq.s32.totalorder %s21, 1
      %p144 = scmp.ne.s32.totalorder %s139, %s141
      %p145 = scmp.eq.s32.totalorder %s21, 0
      %p146 = por %p144, %p145
      %p147 = scmp.ne.s32.totalorder %s139, %s141
      %p148 = scmp.eq.s32.totalorder %s26, 1
      %p149 = por %p147, %p148
      %p150 = scmp.ne.s32.totalorder %s141, %s142
      %p151 = scmp.eq.s32.totalorder %s26, 0
      %p152 = por %p150, %p151
      %p153 = scmp.ne.s32.totalorder %s141, %s142
      %p154 = scmp.eq.s32.totalorder %s27, 1
      %p155 = por %p153, %p154
      %p157 = scmp.ne.s32.totalorder %s142, %s156
      %p158 = scmp.eq.s32.totalorder %s27, 0
      %p159 = por %p157, %p158
      %s161 = sadd.s32 %s160, 1
      %p164 = scmp.eq.s32.totalorder %s21, 1
      %p165 = scmp.ne.s32.totalorder %s160, %s162
      %p166 = scmp.eq.s32.totalorder %s21, 0
      %p167 = por %p165, %p166
      %p168 = scmp.ne.s32.totalorder %s160, %s162
      %p169 = scmp.eq.s32.totalorder %s26, 1
      %p170 = por %p168, %p169
      %p171 = scmp.ne.s32.totalorder %s162, %s163
      %p172 = scmp.eq.s32.totalorder %s26, 0
      %p173 = por %p171, %p172
      %p174 = scmp.ne.s32.totalorder %s162, %s163
      %p175 = scmp.eq.s32.totalorder %s27, 1
      %p176 = por %p174, %p175
      %p178 = scmp.ne.s32.totalorder %s163, %s177
      %p179 = scmp.eq.s32.totalorder %s27, 0
      %p180 = por %p178, %p179
      %s182 = sadd.s32 %s181, 1
      %p185 = scmp.eq.s32.totalorder %s21, 1
      %p186 = scmp.ne.s32.totalorder %s181, %s183
      %p187 = scmp.eq.s32.totalorder %s21, 0
      %p188 = por %p186, %p187
      %p189 = scmp.ne.s32.totalorder %s181, %s183
      %p190 = scmp.eq.s32.totalorder %s26, 1
      %p191 = por %p189, %p190
      %p192 = scmp.ne.s32.totalorder %s183, %s184
      %p193 = scmp.eq.s32.totalorder %s26, 0
      %p194 = por %p192, %p193
      %p195 = scmp.ne.s32.totalorder %s183, %s184
      %p196 = scmp.eq.s32.totalorder %s27, 1
      %p197 = por %p195, %p196
      %p199 = scmp.ne.s32.totalorder %s184, %s198
      %p200 = scmp.eq.s32.totalorder %s27, 0
      %p201 = por %p199, %p200
      %s202 = ssub.s32 %s21, %s28
      %p203 = scmp.eq.s32.totalorder %s202, 0
      %s205 = sadd.s32 %s204, 1
      %s206 = scalar_select %p203, %s204, %s205
      %p209 = pneg %p203
      %p210 = scmp.eq.s32.totalorder %s21, 1
      %p211 = por %p209, %p210
      %p212 = scmp.ne.s32.totalorder %s204, %s207
      %p213 = scmp.eq.s32.totalorder %s21, 0
      %p214 = por %p212, %p213
      %p215 = scmp.ne.s32.totalorder %s204, %s207
      %p216 = scmp.eq.s32.totalorder %s26, 1
      %p217 = por %p215, %p216
      %p218 = scmp.ne.s32.totalorder %s207, %s208
      %p219 = scmp.eq.s32.totalorder %s26, 0
      %p220 = por %p218, %p219
      %p221 = scmp.ne.s32.totalorder %s207, %s208
      %p222 = scmp.eq.s32.totalorder %s27, 1
      %p223 = por %p221, %p222
      %p225 = scmp.ne.s32.totalorder %s208, %s224
      %p226 = scmp.eq.s32.totalorder %s27, 0
      %p227 = por %p225, %p226
      %p228 = scmp.le.s32.totalorder 1, %s21
      %p229 = scmp.lt.s32.totalorder %s21, 3
      %p230 = pnand %p228, %p229
      %p231 = pneg %p230
      // Predicated region
      $region9: #{tpu_custom_call.1} parent=5 // pred_check
        _
      $region10: #{tpu_custom_call.1} parent=5 // pred_check_branch
        %233 = sbr.rel (%p230) target = $region12
      $region11: #{tpu_custom_call.1} parent=5 // pred_region
        %s234 = ssub.s32 %s21, 1
        // Predicated region
        $region13: #{tpu_custom_call.1} parent=11 // pred_check
          %p235 = pneg %p68
        $region14: #{tpu_custom_call.1} parent=11 // pred_check_branch
          %237 = sbr.rel (%p235) target = $region16
        $region15: #{tpu_custom_call.1} parent=11 // pred_region
          %s239 = ssub.s32 512, 512
          %240 = vsyncadd [#allocation6], %s239
          %s241 = sshll.u32 [#allocation5], 4
          %s242 = int_to_ptr.vmem [resolvable:$true] %s241
          %247 = dma.hbm_to_vmem [thread:$0]  %s1, 512, %s242, [#allocation6], 128, 128, 8
        $region16: #{tpu_custom_call.1} parent=11 // pred_fallthru
          _
        // Predicated region
        $region17: #{tpu_custom_call.1} parent=11 // pred_check
          %p248 = pneg %p89
        $region18: #{tpu_custom_call.1} parent=11 // pred_check_branch
          %250 = sbr.rel (%p248) target = $region20
        $region19: #{tpu_custom_call.1} parent=11 // pred_region
          _
        $region20: #{tpu_custom_call.1} parent=11 // pred_fallthru
          _
        // Predicated region
        $region21: #{tpu_custom_call.1} parent=11 // pred_check
          %p251 = pneg %p110
        $region22: #{tpu_custom_call.1} parent=11 // pred_check_branch
          %253 = sbr.rel (%p251) target = $region24
        $region23: #{tpu_custom_call.1} parent=11 // pred_region
          %s255 = ssub.s32 512, 512
          %256 = vsyncadd [#allocation6], %s255
          %s257 = sshll.u32 [#allocation7], 4
          %s258 = int_to_ptr.vmem [resolvable:$true] %s257
          %263 = dma.hbm_to_vmem [thread:$0]  %s3, 512, %s258, [#allocation6], 128, 128, 8
        $region24: #{tpu_custom_call.1} parent=11 // pred_fallthru
          _
        // Predicated region
        $region25: #{tpu_custom_call.1} parent=11 // pred_check
          %p264 = pneg %p131
        $region26: #{tpu_custom_call.1} parent=11 // pred_check_branch
          %266 = sbr.rel (%p264) target = $region28
        $region27: #{tpu_custom_call.1} parent=11 // pred_region
          _
        $region28: #{tpu_custom_call.1} parent=11 // pred_fallthru
          _
        // Predicated region
        $region29: #{tpu_custom_call.1} parent=11 // pred_check
          %p267 = pneg %p152
        $region30: #{tpu_custom_call.1} parent=11 // pred_check_branch
          %269 = sbr.rel (%p267) target = $region32
        $region31: #{tpu_custom_call.1} parent=11 // pred_region
          _
        $region32: #{tpu_custom_call.1} parent=11 // pred_fallthru
          _
        // Predicated region
        $region33: #{tpu_custom_call.1} parent=11 // pred_check
          %p270 = pneg %p173
        $region34: #{tpu_custom_call.1} parent=11 // pred_check_branch
          %272 = sbr.rel (%p270) target = $region36
        $region35: #{tpu_custom_call.1} parent=11 // pred_region
          _
        $region36: #{tpu_custom_call.1} parent=11 // pred_fallthru
          _
        // Predicated region
        $region37: #{tpu_custom_call.1} parent=11 // pred_check
          %p273 = pneg %p194
        $region38: #{tpu_custom_call.1} parent=11 // pred_check_branch
          %275 = sbr.rel (%p273) target = $region40
        $region39: #{tpu_custom_call.1} parent=11 // pred_region
          _
        $region40: #{tpu_custom_call.1} parent=11 // pred_fallthru
          _
      $region12: #{tpu_custom_call.1} parent=5 // pred_fallthru
        _
      %p276 = scmp.lt.s32.totalorder %s21, 2
      // Predicated region
      $region41: #{tpu_custom_call.1} parent=5 // pred_check
        %p277 = pneg %p276
      $region42: #{tpu_custom_call.1} parent=5 // pred_check_branch
        %279 = sbr.rel (%p277) target = $region44
      $region43: #{tpu_custom_call.1} parent=5 // pred_region
        // Predicated region
        $region45: #{tpu_custom_call.1} parent=43 // pred_check
          %p280 = pneg %p41
        $region46: #{tpu_custom_call.1} parent=43 // pred_check_branch
          %282 = sbr.rel (%p280) target = $region48
        $region47: #{tpu_custom_call.1} parent=43 // pred_region
          %s283 = sand.u32 %s31, 1
          %s284 = scalar_lea.sflag [#allocation3], %s283
          %s285 = sand.u32 %s31, 1
          %s286 = smul.addr %s285, 8
          %s287 = scalar_lea.vmem [#allocation2], %s286
          %s289 = ssub.s32 128, 128
          %290 = vsyncadd %s284, %s289
          %s291 = smul.addr %s21, 128
          %s292 = scalar_lea.hbm %s0, %s291
          %s294 = sshll.u32 %s287, 4
          %s295 = int_to_ptr.vmem [resolvable:$true] %s294
          %297 = dma.hbm_to_vmem [thread:$0]  %s292, 128, %s295, %s284
        $region48: #{tpu_custom_call.1} parent=43 // pred_fallthru
          _
      $region44: #{tpu_custom_call.1} parent=5 // pred_fallthru
        _
      %p298 = scmp.le.s32.totalorder 1, %s21
      %p299 = scmp.lt.s32.totalorder %s21, 3
      %p300 = pnand %p298, %p299
      %p301 = pneg %p300
      // Predicated region
      $region49: #{tpu_custom_call.1} parent=5 // pred_check
        _
      $region50: #{tpu_custom_call.1} parent=5 // pred_check_branch
        %303 = sbr.rel (%p300) target = $region52
      $region51: #{tpu_custom_call.1} parent=5 // pred_region
        %s304 = ssub.s32 %s21, 1
        %s305 = sand.u32 %s34, 1
        %s306 = scalar_lea.sflag [#allocation3], %s305
        %s307 = sand.u32 %s34, 1
        %s308 = smul.addr %s307, 8
        %s309 = scalar_lea.vmem [#allocation2], %s308
        // Predicated region
        $region53: #{tpu_custom_call.1} parent=51 // pred_check
          %p310 = pneg %p47
        $region54: #{tpu_custom_call.1} parent=51 // pred_check_branch
          %312 = sbr.rel (%p310) target = $region56
        $region55: #{tpu_custom_call.1} parent=51 // pred_region
          %313 = dma.done %s306, 128
        $region56: #{tpu_custom_call.1} parent=51 // pred_fallthru
          _
        // Predicated region
        $region57: #{tpu_custom_call.1} parent=51 // pred_check
          %p314 = pneg %p68
        $region58: #{tpu_custom_call.1} parent=51 // pred_check_branch
          %316 = sbr.rel (%p314) target = $region60
        $region59: #{tpu_custom_call.1} parent=51 // pred_region
          %317 = dma.done [#allocation6], 512
        $region60: #{tpu_custom_call.1} parent=51 // pred_fallthru
          _
        // Predicated region
        $region61: #{tpu_custom_call.1} parent=51 // pred_check
          %p318 = pneg %p110
        $region62: #{tpu_custom_call.1} parent=51 // pred_check_branch
          %320 = sbr.rel (%p318) target = $region64
        $region63: #{tpu_custom_call.1} parent=51 // pred_region
          %321 = dma.done [#allocation6], 512
        $region64: #{tpu_custom_call.1} parent=51 // pred_fallthru
          _
        %s322 = sand.u32 %s34, 1
        %s323 = scalar_lea.sflag [#allocation3], %s322
        %s324 = sand.u32 %s34, 1
        %s325 = smul.addr %s324, 8
        %s326 = scalar_lea.vmem [#allocation2], %s325
        %p327 = pneg %p47
        %p328 = pneg %p44
        %p329 = pneg %p68
        %p330 = pneg %p65
        %p331 = pneg %p89
        %p332 = pneg %p86
        %p333 = pneg %p110
        %p334 = pneg %p107
        %p335 = pneg %p131
        %p336 = pneg %p128
        %p337 = pneg %p152
        %p338 = pneg %p149
        %p339 = pneg %p173
        %p340 = pneg %p170
        %p341 = pneg %p194
        %p342 = pneg %p191
        %p343 = pneg %p220
        %p344 = pneg %p217
        %s345 = sand.u32 %s207, 1
        %s346 = scalar_lea.sflag [#allocation4], %s345
        %s347 = sand.u32 %s207, 1
        %s348 = smul.addr %s347, 8
        %s349 = scalar_lea.vmem [#allocation8], %s348
        %v350 = vld [vmem:[%s309] sm:$0xff]
        %v351 = vld [vmem:[#allocation5] sm:$0xff]
        %v352 = vld [vmem:[#allocation5 + $0x8] sm:$0xff]
        %v353 = vld [vmem:[#allocation5 + $0x10] sm:$0xff]
        %v354 = vld [vmem:[#allocation5 + $0x18] sm:$0xff]
        %v355 = vld [vmem:[%s2] sm:$0x1]
        %v357 = vlaneseq
        %v358 = vshrl.u32 %v357, 7
        %v359 = vsub.s32 0, %v358
        %v360 = vrot.slane %v355, %v359
        %vm362 = vcmask 261120
        %v364 = vsel %vm362, %v350, 0
        %366 = vmatprep.subr.mxu0 0.0
        %367 = vmatpush1.msra.mxu0 0.0
        %368 = vmatprep.subr.mxu0 0.0
        %369 = vmatpush1.msra.mxu0 0.0
        %370 = vmatprep.subr.mxu0 0.0
        %371 = vmatpush1.msra.mxu0 0.0
        %372 = vmatprep.subr.mxu0 0.0
        %373 = vmatpush1.msra.mxu0 0.0
        %374 = vmatprep.subr.mxu0 0.0
        %375 = vmatpush1.msra.mxu0 0.0
        %376 = vmatprep.subr.mxu0 0.0
        %377 = vmatpush1.msra.mxu0 0.0
        %378 = vmatprep.subr.mxu0 0.0
        %379 = vmatpush1.msra.mxu0 0.0
        %380 = vmatprep.subr.mxu0 0.0
        %381 = vmatpush1.msra.mxu0 0.0
        %382 = vmatprep.subr.mxu0 0.0
        %383 = vmatpush1.msra.mxu0 0.0
        %384 = vmatprep.subr.mxu0 0.0
        %385 = vmatpush1.msra.mxu0 0.0
        %386 = vmatprep.subr.mxu0 0.0
        %387 = vmatpush1.msra.mxu0 0.0
        %388 = vmatprep.subr.mxu0 0.0
        %389 = vmatpush1.msra.mxu0 0.0
        %390 = vmatprep.subr.mxu0 0.0
        %391 = vmatpush1.msra.mxu0 %v354
        %392 = vmatprep.subr.mxu0 0.0
        %393 = vmatpush1.msra.mxu0 %v353
        %394 = vmatprep.subr.mxu0 0.0
        %395 = vmatpush1.msra.mxu0 %v352
        %396 = vmatprep.subr.mxu0 0.0
        %397 = vmatpush1.msra.mxu0 %v351
        %398 = vmatprep.subr.mxu0 0.0
        %399 = vmatpush2.msra.mxu0 0.0
        %400 = vmatprep.subr.mxu0 0.0
        %401 = vmatpush2.msra.mxu0 0.0
        %402 = vmatprep.subr.mxu0 0.0
        %403 = vmatpush2.msra.mxu0 0.0
        %404 = vmatprep.subr.mxu0 0.0
        %405 = vmatpush2.msra.mxu0 0.0
        %406 = vmatprep.subr.mxu0 0.0
        %407 = vmatpush2.msra.mxu0 0.0
        %408 = vmatprep.subr.mxu0 0.0
        %409 = vmatpush2.msra.mxu0 0.0
        %410 = vmatprep.subr.mxu0 0.0
        %411 = vmatpush2.msra.mxu0 0.0
        %412 = vmatprep.subr.mxu0 0.0
        %413 = vmatpush2.msra.mxu0 0.0
        %414 = vmatprep.subr.mxu0 0.0
        %415 = vmatpush2.msra.mxu0 0.0
        %416 = vmatprep.subr.mxu0 0.0
        %417 = vmatpush2.msra.mxu0 0.0
        %418 = vmatprep.subr.mxu0 0.0
        %419 = vmatpush2.msra.mxu0 0.0
        %420 = vmatprep.subr.mxu0 0.0
        %421 = vmatpush2.msra.mxu0 0.0
        %422 = vmatprep.subr.mxu0 0.0
        %423 = vmatpush2.msra.mxu0 0.0
        %424 = vmatprep.subr.mxu0 0.0
        %425 = vmatpush2.msra.mxu0 0.0
        %426 = vmatprep.subr.mxu0 0.0
        %427 = vmatpush2.msra.mxu0 0.0
        %428 = vmatprep.subr.mxu0 0.0
        %429 = vmatpush2.msra.mxu0 0.0
        %430 = vmatprep.mubr.f32.mxu0 0.0
        %431 = vmatmul.mubr.f32.gmra.mxu0 %v364
        %v432 = vpop.f32.mrf.mxu0
        %v433 = vadd.f32 %v360, %v432
        %v434 = vpop.f32.mrf.mxu0
        %435 = vdwg.mxu0
        %v436 = vld [vmem:[#allocation7] sm:$0xff]
        %v437 = vld [vmem:[#allocation7 + $0x8] sm:$0xff]
        %v438 = vld [vmem:[#allocation7 + $0x10] sm:$0xff]
        %v439 = vld [vmem:[#allocation7 + $0x18] sm:$0xff]
        %v440 = vld [vmem:[%s4] sm:$0x1]
        %v441 = vld [vmem:[%s5] sm:$0x1]
        %v442 = vld [vmem:[%s6] sm:$0x1]
        %v443 = vld [vmem:[%s7] sm:$0xff]
        %445 = vrot.lane.b32.xlu0 %v433, 96
        %v446 = vpop.permute.xlu0 %445
        %vm447 = vcmask 64512
        %v448 = vsel %vm447, %v433, 0
        %v450 = vsel %vm447, %v446, 0
        %452 = vmatprep.subr.mxu0 0.0
        %453 = vmatpush1.xpose.msra.mxu0 0.0
        %454 = vmatprep.subr.mxu0 0.0
        %455 = vmatpush1.xpose.msra.mxu0 0.0
        %456 = vmatprep.subr.mxu0 0.0
        %457 = vmatpush1.xpose.msra.mxu0 0.0
        %458 = vmatprep.subr.mxu0 0.0
        %459 = vmatpush1.xpose.msra.mxu0 0.0
        %460 = vmatprep.subr.mxu0 0.0
        %461 = vmatpush1.xpose.msra.mxu0 0.0
        %462 = vmatprep.subr.mxu0 0.0
        %463 = vmatpush1.xpose.msra.mxu0 0.0
        %464 = vmatprep.subr.mxu0 0.0
        %465 = vmatpush1.xpose.msra.mxu0 0.0
        %466 = vmatprep.subr.mxu0 0.0
        %467 = vmatpush1.xpose.msra.mxu0 0.0
        %468 = vmatprep.subr.mxu0 0.0
        %469 = vmatpush1.xpose.msra.mxu0 0.0
        %470 = vmatprep.subr.mxu0 0.0
        %471 = vmatpush1.xpose.msra.mxu0 0.0
        %472 = vmatprep.subr.mxu0 0.0
        %473 = vmatpush1.xpose.msra.mxu0 0.0
        %474 = vmatprep.subr.mxu0 0.0
        %475 = vmatpush1.xpose.msra.mxu0 0.0
        %476 = vmatprep.subr.mxu0 0.0
        %477 = vmatpush1.xpose.msra.mxu0 0.0
        %478 = vmatprep.subr.mxu0 0.0
        %479 = vmatpush1.xpose.msra.mxu0 0.0
        %480 = vmatprep.subr.mxu0 0.0
        %481 = vmatpush1.xpose.msra.mxu0 0.0
        %482 = vmatprep.subr.mxu0 0.0
        %483 = vmatpush1.xpose.msra.mxu0 %v450
        %484 = vmatprep.subr.mxu0 0.0
        %485 = vmatpush2.xpose.msra.mxu0 0.0
        %486 = vmatprep.subr.mxu0 0.0
        %487 = vmatpush2.xpose.msra.mxu0 0.0
        %488 = vmatprep.subr.mxu0 0.0
        %489 = vmatpush2.xpose.msra.mxu0 0.0
        %490 = vmatprep.subr.mxu0 0.0
        %491 = vmatpush2.xpose.msra.mxu0 0.0
        %492 = vmatprep.subr.mxu0 0.0
        %493 = vmatpush2.xpose.msra.mxu0 0.0
        %494 = vmatprep.subr.mxu0 0.0
        %495 = vmatpush2.xpose.msra.mxu0 0.0
        %496 = vmatprep.subr.mxu0 0.0
        %497 = vmatpush2.xpose.msra.mxu0 0.0
        %498 = vmatprep.subr.mxu0 0.0
        %499 = vmatpush2.xpose.msra.mxu0 0.0
        %500 = vmatprep.subr.mxu0 0.0
        %501 = vmatpush2.xpose.msra.mxu0 0.0
        %502 = vmatprep.subr.mxu0 0.0
        %503 = vmatpush2.xpose.msra.mxu0 0.0
        %504 = vmatprep.subr.mxu0 0.0
        %505 = vmatpush2.xpose.msra.mxu0 0.0
        %506 = vmatprep.subr.mxu0 0.0
        %507 = vmatpush2.xpose.msra.mxu0 0.0
        %508 = vmatprep.subr.mxu0 0.0
        %509 = vmatpush2.xpose.msra.mxu0 0.0
        %510 = vmatprep.subr.mxu0 0.0
        %511 = vmatpush2.xpose.msra.mxu0 0.0
        %512 = vmatprep.subr.mxu0 0.0
        %513 = vmatpush2.xpose.msra.mxu0 0.0
        %514 = vmatprep.subr.mxu0 0.0
        %515 = vmatpush2.xpose.msra.mxu0 0.0
        %516 = vmatprep.mubr.f32.mxu0 0.0
        %517 = vmatmul.mubr.f32.gmra.mxu0 %v448
        %v518 = vpop.f32.mrf.mxu0
        %v519 = vadd.f32 0.0, %v518
        %v520 = vpop.f32.mrf.mxu0
        %521 = vdwg.mxu0
        %v522 = vmul.f32 %v519, 0.17677669
        %v523 = vadd.f32 %v522, %v443
        %v524 = vsel %vm447, %v523, -inf
        %525 = vmax.xlane.f32.xlu0 %v524
        %v526 = vpop.xlane.xlu0 %525
        %v527 = vsub.f32 %v523, %v526
        %v528 = vmul.f32 %v527, 1.442695
        %v529 = vpow.pop %v528
        %v530 = vsel %vm447, %v529, 0.0
        %531 = vadd.xlane.f32.xlu0 %v530
        %v532 = vpop.xlane.xlu0 %531
        %v533 = vrcp.pop %v532
        %v534 = vmul.f32 %v529, %v533
        %535 = vrot.lane.b32.xlu0 %v433, 64
        %v536 = vpop.permute.xlu0 %535
        %v539 = vsel %vm447, %v534, 0
        %541 = vmatprep.subr.mxu0 0.0
        %542 = vmatpush1.msra.mxu0 0.0
        %543 = vmatprep.subr.mxu0 0.0
        %544 = vmatpush1.msra.mxu0 0.0
        %545 = vmatprep.subr.mxu0 0.0
        %546 = vmatpush1.msra.mxu0 0.0
        %547 = vmatprep.subr.mxu0 0.0
        %548 = vmatpush1.msra.mxu0 0.0
        %549 = vmatprep.subr.mxu0 0.0
        %550 = vmatpush1.msra.mxu0 0.0
        %551 = vmatprep.subr.mxu0 0.0
        %552 = vmatpush1.msra.mxu0 0.0
        %553 = vmatprep.subr.mxu0 0.0
        %554 = vmatpush1.msra.mxu0 0.0
        %555 = vmatprep.subr.mxu0 0.0
        %556 = vmatpush1.msra.mxu0 0.0
        %557 = vmatprep.subr.mxu0 0.0
        %558 = vmatpush1.msra.mxu0 0.0
        %559 = vmatprep.subr.mxu0 0.0
        %560 = vmatpush1.msra.mxu0 0.0
        %561 = vmatprep.subr.mxu0 0.0
        %562 = vmatpush1.msra.mxu0 0.0
        %563 = vmatprep.subr.mxu0 0.0
        %564 = vmatpush1.msra.mxu0 0.0
        %565 = vmatprep.subr.mxu0 0.0
        %566 = vmatpush1.msra.mxu0 0.0
        %567 = vmatprep.subr.mxu0 0.0
        %568 = vmatpush1.msra.mxu0 0.0
        %569 = vmatprep.subr.mxu0 0.0
        %570 = vmatpush1.msra.mxu0 0.0
        %571 = vmatprep.subr.mxu0 0.0
        %572 = vmatpush1.msra.mxu0 %v536
        %573 = vmatprep.subr.mxu0 0.0
        %574 = vmatpush2.msra.mxu0 0.0
        %575 = vmatprep.subr.mxu0 0.0
        %576 = vmatpush2.msra.mxu0 0.0
        %577 = vmatprep.subr.mxu0 0.0
        %578 = vmatpush2.msra.mxu0 0.0
        %579 = vmatprep.subr.mxu0 0.0
        %580 = vmatpush2.msra.mxu0 0.0
        %581 = vmatprep.subr.mxu0 0.0
        %582 = vmatpush2.msra.mxu0 0.0
        %583 = vmatprep.subr.mxu0 0.0
        %584 = vmatpush2.msra.mxu0 0.0
        %585 = vmatprep.subr.mxu0 0.0
        %586 = vmatpush2.msra.mxu0 0.0
        %587 = vmatprep.subr.mxu0 0.0
        %588 = vmatpush2.msra.mxu0 0.0
        %589 = vmatprep.subr.mxu0 0.0
        %590 = vmatpush2.msra.mxu0 0.0
        %591 = vmatprep.subr.mxu0 0.0
        %592 = vmatpush2.msra.mxu0 0.0
        %593 = vmatprep.subr.mxu0 0.0
        %594 = vmatpush2.msra.mxu0 0.0
        %595 = vmatprep.subr.mxu0 0.0
        %596 = vmatpush2.msra.mxu0 0.0
        %597 = vmatprep.subr.mxu0 0.0
        %598 = vmatpush2.msra.mxu0 0.0
        %599 = vmatprep.subr.mxu0 0.0
        %600 = vmatpush2.msra.mxu0 0.0
        %601 = vmatprep.subr.mxu0 0.0
        %602 = vmatpush2.msra.mxu0 0.0
        %603 = vmatprep.subr.mxu0 0.0
        %604 = vmatpush2.msra.mxu0 0.0
        %605 = vmatprep.mubr.f32.mxu0 0.0
        %606 = vmatmul.mubr.f32.gmra.mxu0 %v539
        %v607 = vpop.f32.mrf.mxu0
        %v608 = vadd.f32 0.0, %v607
        %v609 = vpop.f32.mrf.mxu0
        %610 = vdwg.mxu0
        %611 = vrot.lane.b32.xlu0 %v433, 120
        %v612 = vpop.permute.xlu0 %611
        %613 = vrot.lane.b32.xlu0 %v433, 88
        %v614 = vpop.permute.xlu0 %613
        %v615 = vsel %vm447, %v612, 0
        %v617 = vsel %vm447, %v614, 0
        %619 = vmatprep.subr.mxu0 0.0
        %620 = vmatpush1.xpose.msra.mxu0 0.0
        %621 = vmatprep.subr.mxu0 0.0
        %622 = vmatpush1.xpose.msra.mxu0 0.0
        %623 = vmatprep.subr.mxu0 0.0
        %624 = vmatpush1.xpose.msra.mxu0 0.0
        %625 = vmatprep.subr.mxu0 0.0
        %626 = vmatpush1.xpose.msra.mxu0 0.0
        %627 = vmatprep.subr.mxu0 0.0
        %628 = vmatpush1.xpose.msra.mxu0 0.0
        %629 = vmatprep.subr.mxu0 0.0
        %630 = vmatpush1.xpose.msra.mxu0 0.0
        %631 = vmatprep.subr.mxu0 0.0
        %632 = vmatpush1.xpose.msra.mxu0 0.0
        %633 = vmatprep.subr.mxu0 0.0
        %634 = vmatpush1.xpose.msra.mxu0 0.0
        %635 = vmatprep.subr.mxu0 0.0
        %636 = vmatpush1.xpose.msra.mxu0 0.0
        %637 = vmatprep.subr.mxu0 0.0
        %638 = vmatpush1.xpose.msra.mxu0 0.0
        %639 = vmatprep.subr.mxu0 0.0
        %640 = vmatpush1.xpose.msra.mxu0 0.0
        %641 = vmatprep.subr.mxu0 0.0
        %642 = vmatpush1.xpose.msra.mxu0 0.0
        %643 = vmatprep.subr.mxu0 0.0
        %644 = vmatpush1.xpose.msra.mxu0 0.0
        %645 = vmatprep.subr.mxu0 0.0
        %646 = vmatpush1.xpose.msra.mxu0 0.0
        %647 = vmatprep.subr.mxu0 0.0
        %648 = vmatpush1.xpose.msra.mxu0 0.0
        %649 = vmatprep.subr.mxu0 0.0
        %650 = vmatpush1.xpose.msra.mxu0 %v617
        %651 = vmatprep.subr.mxu0 0.0
        %652 = vmatpush2.xpose.msra.mxu0 0.0
        %653 = vmatprep.subr.mxu0 0.0
        %654 = vmatpush2.xpose.msra.mxu0 0.0
        %655 = vmatprep.subr.mxu0 0.0
        %656 = vmatpush2.xpose.msra.mxu0 0.0
        %657 = vmatprep.subr.mxu0 0.0
        %658 = vmatpush2.xpose.msra.mxu0 0.0
        %659 = vmatprep.subr.mxu0 0.0
        %660 = vmatpush2.xpose.msra.mxu0 0.0
        %661 = vmatprep.subr.mxu0 0.0
        %662 = vmatpush2.xpose.msra.mxu0 0.0
        %663 = vmatprep.subr.mxu0 0.0
        %664 = vmatpush2.xpose.msra.mxu0 0.0
        %665 = vmatprep.subr.mxu0 0.0
        %666 = vmatpush2.xpose.msra.mxu0 0.0
        %667 = vmatprep.subr.mxu0 0.0
        %668 = vmatpush2.xpose.msra.mxu0 0.0
        %669 = vmatprep.subr.mxu0 0.0
        %670 = vmatpush2.xpose.msra.mxu0 0.0
        %671 = vmatprep.subr.mxu0 0.0
        %672 = vmatpush2.xpose.msra.mxu0 0.0
        %673 = vmatprep.subr.mxu0 0.0
        %674 = vmatpush2.xpose.msra.mxu0 0.0
        %675 = vmatprep.subr.mxu0 0.0
        %676 = vmatpush2.xpose.msra.mxu0 0.0
        %677 = vmatprep.subr.mxu0 0.0
        %678 = vmatpush2.xpose.msra.mxu0 0.0
        %679 = vmatprep.subr.mxu0 0.0
        %680 = vmatpush2.xpose.msra.mxu0 0.0
        %681 = vmatprep.subr.mxu0 0.0
        %682 = vmatpush2.xpose.msra.mxu0 0.0
        %683 = vmatprep.mubr.f32.mxu0 0.0
        %684 = vmatmul.mubr.f32.gmra.mxu0 %v615
        %v685 = vpop.f32.mrf.mxu0
        %v686 = vadd.f32 0.0, %v685
        %v687 = vpop.f32.mrf.mxu0
        %688 = vdwg.mxu0
        %v689 = vmul.f32 %v686, 0.17677669
        %v690 = vadd.f32 %v689, %v443
        %v691 = vsel %vm447, %v690, -inf
        %692 = vmax.xlane.f32.xlu0 %v691
        %v693 = vpop.xlane.xlu0 %692
        %v694 = vsub.f32 %v690, %v693
        %v695 = vmul.f32 %v694, 1.442695
        %v696 = vpow.pop %v695
        %v697 = vsel %vm447, %v696, 0.0
        %698 = vadd.xlane.f32.xlu0 %v697
        %v699 = vpop.xlane.xlu0 %698
        %v700 = vrcp.pop %v699
        %v701 = vmul.f32 %v696, %v700
        %702 = vrot.lane.b32.xlu0 %v433, 56
        %v703 = vpop.permute.xlu0 %702
        %v706 = vsel %vm447, %v701, 0
        %708 = vmatprep.subr.mxu0 0.0
        %709 = vmatpush1.msra.mxu0 0.0
        %710 = vmatprep.subr.mxu0 0.0
        %711 = vmatpush1.msra.mxu0 0.0
        %712 = vmatprep.subr.mxu0 0.0
        %713 = vmatpush1.msra.mxu0 0.0
        %714 = vmatprep.subr.mxu0 0.0
        %715 = vmatpush1.msra.mxu0 0.0
        %716 = vmatprep.subr.mxu0 0.0
        %717 = vmatpush1.msra.mxu0 0.0
        %718 = vmatprep.subr.mxu0 0.0
        %719 = vmatpush1.msra.mxu0 0.0
        %720 = vmatprep.subr.mxu0 0.0
        %721 = vmatpush1.msra.mxu0 0.0
        %722 = vmatprep.subr.mxu0 0.0
        %723 = vmatpush1.msra.mxu0 0.0
        %724 = vmatprep.subr.mxu0 0.0
        %725 = vmatpush1.msra.mxu0 0.0
        %726 = vmatprep.subr.mxu0 0.0
        %727 = vmatpush1.msra.mxu0 0.0
        %728 = vmatprep.subr.mxu0 0.0
        %729 = vmatpush1.msra.mxu0 0.0
        %730 = vmatprep.subr.mxu0 0.0
        %731 = vmatpush1.msra.mxu0 0.0
        %732 = vmatprep.subr.mxu0 0.0
        %733 = vmatpush1.msra.mxu0 0.0
        %734 = vmatprep.subr.mxu0 0.0
        %735 = vmatpush1.msra.mxu0 0.0
        %736 = vmatprep.subr.mxu0 0.0
        %737 = vmatpush1.msra.mxu0 0.0
        %738 = vmatprep.subr.mxu0 0.0
        %739 = vmatpush1.msra.mxu0 %v703
        %740 = vmatprep.subr.mxu0 0.0
        %741 = vmatpush2.msra.mxu0 0.0
        %742 = vmatprep.subr.mxu0 0.0
        %743 = vmatpush2.msra.mxu0 0.0
        %744 = vmatprep.subr.mxu0 0.0
        %745 = vmatpush2.msra.mxu0 0.0
        %746 = vmatprep.subr.mxu0 0.0
        %747 = vmatpush2.msra.mxu0 0.0
        %748 = vmatprep.subr.mxu0 0.0
        %749 = vmatpush2.msra.mxu0 0.0
        %750 = vmatprep.subr.mxu0 0.0
        %751 = vmatpush2.msra.mxu0 0.0
        %752 = vmatprep.subr.mxu0 0.0
        %753 = vmatpush2.msra.mxu0 0.0
        %754 = vmatprep.subr.mxu0 0.0
        %755 = vmatpush2.msra.mxu0 0.0
        %756 = vmatprep.subr.mxu0 0.0
        %757 = vmatpush2.msra.mxu0 0.0
        %758 = vmatprep.subr.mxu0 0.0
        %759 = vmatpush2.msra.mxu0 0.0
        %760 = vmatprep.subr.mxu0 0.0
        %761 = vmatpush2.msra.mxu0 0.0
        %762 = vmatprep.subr.mxu0 0.0
        %763 = vmatpush2.msra.mxu0 0.0
        %764 = vmatprep.subr.mxu0 0.0
        %765 = vmatpush2.msra.mxu0 0.0
        %766 = vmatprep.subr.mxu0 0.0
        %767 = vmatpush2.msra.mxu0 0.0
        %768 = vmatprep.subr.mxu0 0.0
        %769 = vmatpush2.msra.mxu0 0.0
        %770 = vmatprep.subr.mxu0 0.0
        %771 = vmatpush2.msra.mxu0 0.0
        %772 = vmatprep.mubr.f32.mxu0 0.0
        %773 = vmatmul.mubr.f32.gmra.mxu0 %v706
        %v774 = vpop.f32.mrf.mxu0
        %v775 = vadd.f32 0.0, %v774
        %v776 = vpop.f32.mrf.mxu0
        %777 = vdwg.mxu0
        %v779 = vsel %vm447, %v775, 0
        %781 = vmatprep.subr.mxu0 0.0
        %782 = vmatpush1.msra.mxu0 0.0
        %783 = vmatprep.subr.mxu0 0.0
        %784 = vmatpush1.msra.mxu0 0.0
        %785 = vmatprep.subr.mxu0 0.0
        %786 = vmatpush1.msra.mxu0 0.0
        %787 = vmatprep.subr.mxu0 0.0
        %788 = vmatpush1.msra.mxu0 0.0
        %789 = vmatprep.subr.mxu0 0.0
        %790 = vmatpush1.msra.mxu0 0.0
        %791 = vmatprep.subr.mxu0 0.0
        %792 = vmatpush1.msra.mxu0 0.0
        %793 = vmatprep.subr.mxu0 0.0
        %794 = vmatpush1.msra.mxu0 0.0
        %795 = vmatprep.subr.mxu0 0.0
        %796 = vmatpush1.msra.mxu0 0.0
        %797 = vmatprep.subr.mxu0 0.0
        %798 = vmatpush1.msra.mxu0 0.0
        %799 = vmatprep.subr.mxu0 0.0
        %800 = vmatpush1.msra.mxu0 0.0
        %801 = vmatprep.subr.mxu0 0.0
        %802 = vmatpush1.msra.mxu0 0.0
        %803 = vmatprep.subr.mxu0 0.0
        %804 = vmatpush1.msra.mxu0 0.0
        %805 = vmatprep.subr.mxu0 0.0
        %806 = vmatpush1.msra.mxu0 0.0
        %807 = vmatprep.subr.mxu0 0.0
        %808 = vmatpush1.msra.mxu0 0.0
        %809 = vmatprep.subr.mxu0 0.0
        %810 = vmatpush1.msra.mxu0 0.0
        %811 = vmatprep.subr.mxu0 0.0
        %812 = vmatpush1.msra.mxu0 %v437
        %813 = vmatprep.subr.mxu0 0.0
        %814 = vmatpush2.msra.mxu0 0.0
        %815 = vmatprep.subr.mxu0 0.0
        %816 = vmatpush2.msra.mxu0 0.0
        %817 = vmatprep.subr.mxu0 0.0
        %818 = vmatpush2.msra.mxu0 0.0
        %819 = vmatprep.subr.mxu0 0.0
        %820 = vmatpush2.msra.mxu0 0.0
        %821 = vmatprep.subr.mxu0 0.0
        %822 = vmatpush2.msra.mxu0 0.0
        %823 = vmatprep.subr.mxu0 0.0
        %824 = vmatpush2.msra.mxu0 0.0
        %825 = vmatprep.subr.mxu0 0.0
        %826 = vmatpush2.msra.mxu0 0.0
        %827 = vmatprep.subr.mxu0 0.0
        %828 = vmatpush2.msra.mxu0 0.0
        %829 = vmatprep.subr.mxu0 0.0
        %830 = vmatpush2.msra.mxu0 0.0
        %831 = vmatprep.subr.mxu0 0.0
        %832 = vmatpush2.msra.mxu0 0.0
        %833 = vmatprep.subr.mxu0 0.0
        %834 = vmatpush2.msra.mxu0 0.0
        %835 = vmatprep.subr.mxu0 0.0
        %836 = vmatpush2.msra.mxu0 0.0
        %837 = vmatprep.subr.mxu0 0.0
        %838 = vmatpush2.msra.mxu0 0.0
        %839 = vmatprep.subr.mxu0 0.0
        %840 = vmatpush2.msra.mxu0 0.0
        %841 = vmatprep.subr.mxu0 0.0
        %842 = vmatpush2.msra.mxu0 0.0
        %843 = vmatprep.subr.mxu0 0.0
        %844 = vmatpush2.msra.mxu0 0.0
        %845 = vmatprep.mubr.f32.mxu0 0.0
        %846 = vmatmul.mubr.f32.gmra.mxu0 %v779
        %v847 = vpop.f32.mrf.mxu0
        %v848 = vadd.f32 0.0, %v847
        %v849 = vpop.f32.mrf.mxu0
        %850 = vdwg.mxu0
        %v852 = vsel %vm447, %v608, 0
        %854 = vmatprep.subr.mxu0 0.0
        %855 = vmatpush1.msra.mxu0 0.0
        %856 = vmatprep.subr.mxu0 0.0
        %857 = vmatpush1.msra.mxu0 0.0
        %858 = vmatprep.subr.mxu0 0.0
        %859 = vmatpush1.msra.mxu0 0.0
        %860 = vmatprep.subr.mxu0 0.0
        %861 = vmatpush1.msra.mxu0 0.0
        %862 = vmatprep.subr.mxu0 0.0
        %863 = vmatpush1.msra.mxu0 0.0
        %864 = vmatprep.subr.mxu0 0.0
        %865 = vmatpush1.msra.mxu0 0.0
        %866 = vmatprep.subr.mxu0 0.0
        %867 = vmatpush1.msra.mxu0 0.0
        %868 = vmatprep.subr.mxu0 0.0
        %869 = vmatpush1.msra.mxu0 0.0
        %870 = vmatprep.subr.mxu0 0.0
        %871 = vmatpush1.msra.mxu0 0.0
        %872 = vmatprep.subr.mxu0 0.0
        %873 = vmatpush1.msra.mxu0 0.0
        %874 = vmatprep.subr.mxu0 0.0
        %875 = vmatpush1.msra.mxu0 0.0
        %876 = vmatprep.subr.mxu0 0.0
        %877 = vmatpush1.msra.mxu0 0.0
        %878 = vmatprep.subr.mxu0 0.0
        %879 = vmatpush1.msra.mxu0 0.0
        %880 = vmatprep.subr.mxu0 0.0
        %881 = vmatpush1.msra.mxu0 0.0
        %882 = vmatprep.subr.mxu0 0.0
        %883 = vmatpush1.msra.mxu0 0.0
        %884 = vmatprep.subr.mxu0 0.0
        %885 = vmatpush1.msra.mxu0 %v436
        %886 = vmatprep.subr.mxu0 0.0
        %887 = vmatpush2.msra.mxu0 0.0
        %888 = vmatprep.subr.mxu0 0.0
        %889 = vmatpush2.msra.mxu0 0.0
        %890 = vmatprep.subr.mxu0 0.0
        %891 = vmatpush2.msra.mxu0 0.0
        %892 = vmatprep.subr.mxu0 0.0
        %893 = vmatpush2.msra.mxu0 0.0
        %894 = vmatprep.subr.mxu0 0.0
        %895 = vmatpush2.msra.mxu0 0.0
        %896 = vmatprep.subr.mxu0 0.0
        %897 = vmatpush2.msra.mxu0 0.0
        %898 = vmatprep.subr.mxu0 0.0
        %899 = vmatpush2.msra.mxu0 0.0
        %900 = vmatprep.subr.mxu0 0.0
        %901 = vmatpush2.msra.mxu0 0.0
        %902 = vmatprep.subr.mxu0 0.0
        %903 = vmatpush2.msra.mxu0 0.0
        %904 = vmatprep.subr.mxu0 0.0
        %905 = vmatpush2.msra.mxu0 0.0
        %906 = vmatprep.subr.mxu0 0.0
        %907 = vmatpush2.msra.mxu0 0.0
        %908 = vmatprep.subr.mxu0 0.0
        %909 = vmatpush2.msra.mxu0 0.0
        %910 = vmatprep.subr.mxu0 0.0
        %911 = vmatpush2.msra.mxu0 0.0
        %912 = vmatprep.subr.mxu0 0.0
        %913 = vmatpush2.msra.mxu0 0.0
        %914 = vmatprep.subr.mxu0 0.0
        %915 = vmatpush2.msra.mxu0 0.0
        %916 = vmatprep.subr.mxu0 0.0
        %917 = vmatpush2.msra.mxu0 0.0
        %918 = vmatprep.mubr.f32.mxu0 0.0
        %919 = vmatmul.mubr.f32.gmra.mxu0 %v852
        %v920 = vpop.f32.mrf.mxu0
        %v921 = vadd.f32 %v848, %v920
        %v922 = vpop.f32.mrf.mxu0
        %923 = vdwg.mxu0
        %924 = vrot.lane.b32.xlu0 %v433, 112
        %v925 = vpop.permute.xlu0 %924
        %926 = vrot.lane.b32.xlu0 %v433, 80
        %v927 = vpop.permute.xlu0 %926
        %v928 = vsel %vm447, %v925, 0
        %v930 = vsel %vm447, %v927, 0
        %932 = vmatprep.subr.mxu0 0.0
        %933 = vmatpush1.xpose.msra.mxu0 0.0
        %934 = vmatprep.subr.mxu0 0.0
        %935 = vmatpush1.xpose.msra.mxu0 0.0
        %936 = vmatprep.subr.mxu0 0.0
        %937 = vmatpush1.xpose.msra.mxu0 0.0
        %938 = vmatprep.subr.mxu0 0.0
        %939 = vmatpush1.xpose.msra.mxu0 0.0
        %940 = vmatprep.subr.mxu0 0.0
        %941 = vmatpush1.xpose.msra.mxu0 0.0
        %942 = vmatprep.subr.mxu0 0.0
        %943 = vmatpush1.xpose.msra.mxu0 0.0
        %944 = vmatprep.subr.mxu0 0.0
        %945 = vmatpush1.xpose.msra.mxu0 0.0
        %946 = vmatprep.subr.mxu0 0.0
        %947 = vmatpush1.xpose.msra.mxu0 0.0
        %948 = vmatprep.subr.mxu0 0.0
        %949 = vmatpush1.xpose.msra.mxu0 0.0
        %950 = vmatprep.subr.mxu0 0.0
        %951 = vmatpush1.xpose.msra.mxu0 0.0
        %952 = vmatprep.subr.mxu0 0.0
        %953 = vmatpush1.xpose.msra.mxu0 0.0
        %954 = vmatprep.subr.mxu0 0.0
        %955 = vmatpush1.xpose.msra.mxu0 0.0
        %956 = vmatprep.subr.mxu0 0.0
        %957 = vmatpush1.xpose.msra.mxu0 0.0
        %958 = vmatprep.subr.mxu0 0.0
        %959 = vmatpush1.xpose.msra.mxu0 0.0
        %960 = vmatprep.subr.mxu0 0.0
        %961 = vmatpush1.xpose.msra.mxu0 0.0
        %962 = vmatprep.subr.mxu0 0.0
        %963 = vmatpush1.xpose.msra.mxu0 %v930
        %964 = vmatprep.subr.mxu0 0.0
        %965 = vmatpush2.xpose.msra.mxu0 0.0
        %966 = vmatprep.subr.mxu0 0.0
        %967 = vmatpush2.xpose.msra.mxu0 0.0
        %968 = vmatprep.subr.mxu0 0.0
        %969 = vmatpush2.xpose.msra.mxu0 0.0
        %970 = vmatprep.subr.mxu0 0.0
        %971 = vmatpush2.xpose.msra.mxu0 0.0
        %972 = vmatprep.subr.mxu0 0.0
        %973 = vmatpush2.xpose.msra.mxu0 0.0
        %974 = vmatprep.subr.mxu0 0.0
        %975 = vmatpush2.xpose.msra.mxu0 0.0
        %976 = vmatprep.subr.mxu0 0.0
        %977 = vmatpush2.xpose.msra.mxu0 0.0
        %978 = vmatprep.subr.mxu0 0.0
        %979 = vmatpush2.xpose.msra.mxu0 0.0
        %980 = vmatprep.subr.mxu0 0.0
        %981 = vmatpush2.xpose.msra.mxu0 0.0
        %982 = vmatprep.subr.mxu0 0.0
        %983 = vmatpush2.xpose.msra.mxu0 0.0
        %984 = vmatprep.subr.mxu0 0.0
        %985 = vmatpush2.xpose.msra.mxu0 0.0
        %986 = vmatprep.subr.mxu0 0.0
        %987 = vmatpush2.xpose.msra.mxu0 0.0
        %988 = vmatprep.subr.mxu0 0.0
        %989 = vmatpush2.xpose.msra.mxu0 0.0
        %990 = vmatprep.subr.mxu0 0.0
        %991 = vmatpush2.xpose.msra.mxu0 0.0
        %992 = vmatprep.subr.mxu0 0.0
        %993 = vmatpush2.xpose.msra.mxu0 0.0
        %994 = vmatprep.subr.mxu0 0.0
        %995 = vmatpush2.xpose.msra.mxu0 0.0
        %996 = vmatprep.mubr.f32.mxu0 0.0
        %997 = vmatmul.mubr.f32.gmra.mxu0 %v928
        %v998 = vpop.f32.mrf.mxu0
        %v999 = vadd.f32 0.0, %v998
        %v1000 = vpop.f32.mrf.mxu0
        %1001 = vdwg.mxu0
        %v1002 = vmul.f32 %v999, 0.17677669
        %v1003 = vadd.f32 %v1002, %v443
        %v1004 = vsel %vm447, %v1003, -inf
        %1005 = vmax.xlane.f32.xlu0 %v1004
        %v1006 = vpop.xlane.xlu0 %1005
        %v1007 = vsub.f32 %v1003, %v1006
        %v1008 = vmul.f32 %v1007, 1.442695
        %v1009 = vpow.pop %v1008
        %v1010 = vsel %vm447, %v1009, 0.0
        %1011 = vadd.xlane.f32.xlu0 %v1010
        %v1012 = vpop.xlane.xlu0 %1011
        %v1013 = vrcp.pop %v1012
        %v1014 = vmul.f32 %v1009, %v1013
        %1015 = vrot.lane.b32.xlu0 %v433, 48
        %v1016 = vpop.permute.xlu0 %1015
        %v1019 = vsel %vm447, %v1014, 0
        %1021 = vmatprep.subr.mxu0 0.0
        %1022 = vmatpush1.msra.mxu0 0.0
        %1023 = vmatprep.subr.mxu0 0.0
        %1024 = vmatpush1.msra.mxu0 0.0
        %1025 = vmatprep.subr.mxu0 0.0
        %1026 = vmatpush1.msra.mxu0 0.0
        %1027 = vmatprep.subr.mxu0 0.0
        %1028 = vmatpush1.msra.mxu0 0.0
        %1029 = vmatprep.subr.mxu0 0.0
        %1030 = vmatpush1.msra.mxu0 0.0
        %1031 = vmatprep.subr.mxu0 0.0
        %1032 = vmatpush1.msra.mxu0 0.0
        %1033 = vmatprep.subr.mxu0 0.0
        %1034 = vmatpush1.msra.mxu0 0.0
        %1035 = vmatprep.subr.mxu0 0.0
        %1036 = vmatpush1.msra.mxu0 0.0
        %1037 = vmatprep.subr.mxu0 0.0
        %1038 = vmatpush1.msra.mxu0 0.0
        %1039 = vmatprep.subr.mxu0 0.0
        %1040 = vmatpush1.msra.mxu0 0.0
        %1041 = vmatprep.subr.mxu0 0.0
        %1042 = vmatpush1.msra.mxu0 0.0
        %1043 = vmatprep.subr.mxu0 0.0
        %1044 = vmatpush1.msra.mxu0 0.0
        %1045 = vmatprep.subr.mxu0 0.0
        %1046 = vmatpush1.msra.mxu0 0.0
        %1047 = vmatprep.subr.mxu0 0.0
        %1048 = vmatpush1.msra.mxu0 0.0
        %1049 = vmatprep.subr.mxu0 0.0
        %1050 = vmatpush1.msra.mxu0 0.0
        %1051 = vmatprep.subr.mxu0 0.0
        %1052 = vmatpush1.msra.mxu0 %v1016
        %1053 = vmatprep.subr.mxu0 0.0
        %1054 = vmatpush2.msra.mxu0 0.0
        %1055 = vmatprep.subr.mxu0 0.0
        %1056 = vmatpush2.msra.mxu0 0.0
        %1057 = vmatprep.subr.mxu0 0.0
        %1058 = vmatpush2.msra.mxu0 0.0
        %1059 = vmatprep.subr.mxu0 0.0
        %1060 = vmatpush2.msra.mxu0 0.0
        %1061 = vmatprep.subr.mxu0 0.0
        %1062 = vmatpush2.msra.mxu0 0.0
        %1063 = vmatprep.subr.mxu0 0.0
        %1064 = vmatpush2.msra.mxu0 0.0
        %1065 = vmatprep.subr.mxu0 0.0
        %1066 = vmatpush2.msra.mxu0 0.0
        %1067 = vmatprep.subr.mxu0 0.0
        %1068 = vmatpush2.msra.mxu0 0.0
        %1069 = vmatprep.subr.mxu0 0.0
        %1070 = vmatpush2.msra.mxu0 0.0
        %1071 = vmatprep.subr.mxu0 0.0
        %1072 = vmatpush2.msra.mxu0 0.0
        %1073 = vmatprep.subr.mxu0 0.0
        %1074 = vmatpush2.msra.mxu0 0.0
        %1075 = vmatprep.subr.mxu0 0.0
        %1076 = vmatpush2.msra.mxu0 0.0
        %1077 = vmatprep.subr.mxu0 0.0
        %1078 = vmatpush2.msra.mxu0 0.0
        %1079 = vmatprep.subr.mxu0 0.0
        %1080 = vmatpush2.msra.mxu0 0.0
        %1081 = vmatprep.subr.mxu0 0.0
        %1082 = vmatpush2.msra.mxu0 0.0
        %1083 = vmatprep.subr.mxu0 0.0
        %1084 = vmatpush2.msra.mxu0 0.0
        %1085 = vmatprep.mubr.f32.mxu0 0.0
        %1086 = vmatmul.mubr.f32.gmra.mxu0 %v1019
        %v1087 = vpop.f32.mrf.mxu0
        %v1088 = vadd.f32 0.0, %v1087
        %v1089 = vpop.f32.mrf.mxu0
        %1090 = vdwg.mxu0
        %v1092 = vsel %vm447, %v1088, 0
        %1094 = vmatprep.subr.mxu0 0.0
        %1095 = vmatpush1.msra.mxu0 0.0
        %1096 = vmatprep.subr.mxu0 0.0
        %1097 = vmatpush1.msra.mxu0 0.0
        %1098 = vmatprep.subr.mxu0 0.0
        %1099 = vmatpush1.msra.mxu0 0.0
        %1100 = vmatprep.subr.mxu0 0.0
        %1101 = vmatpush1.msra.mxu0 0.0
        %1102 = vmatprep.subr.mxu0 0.0
        %1103 = vmatpush1.msra.mxu0 0.0
        %1104 = vmatprep.subr.mxu0 0.0
        %1105 = vmatpush1.msra.mxu0 0.0
        %1106 = vmatprep.subr.mxu0 0.0
        %1107 = vmatpush1.msra.mxu0 0.0
        %1108 = vmatprep.subr.mxu0 0.0
        %1109 = vmatpush1.msra.mxu0 0.0
        %1110 = vmatprep.subr.mxu0 0.0
        %1111 = vmatpush1.msra.mxu0 0.0
        %1112 = vmatprep.subr.mxu0 0.0
        %1113 = vmatpush1.msra.mxu0 0.0
        %1114 = vmatprep.subr.mxu0 0.0
        %1115 = vmatpush1.msra.mxu0 0.0
        %1116 = vmatprep.subr.mxu0 0.0
        %1117 = vmatpush1.msra.mxu0 0.0
        %1118 = vmatprep.subr.mxu0 0.0
        %1119 = vmatpush1.msra.mxu0 0.0
        %1120 = vmatprep.subr.mxu0 0.0
        %1121 = vmatpush1.msra.mxu0 0.0
        %1122 = vmatprep.subr.mxu0 0.0
        %1123 = vmatpush1.msra.mxu0 0.0
        %1124 = vmatprep.subr.mxu0 0.0
        %1125 = vmatpush1.msra.mxu0 %v438
        %1126 = vmatprep.subr.mxu0 0.0
        %1127 = vmatpush2.msra.mxu0 0.0
        %1128 = vmatprep.subr.mxu0 0.0
        %1129 = vmatpush2.msra.mxu0 0.0
        %1130 = vmatprep.subr.mxu0 0.0
        %1131 = vmatpush2.msra.mxu0 0.0
        %1132 = vmatprep.subr.mxu0 0.0
        %1133 = vmatpush2.msra.mxu0 0.0
        %1134 = vmatprep.subr.mxu0 0.0
        %1135 = vmatpush2.msra.mxu0 0.0
        %1136 = vmatprep.subr.mxu0 0.0
        %1137 = vmatpush2.msra.mxu0 0.0
        %1138 = vmatprep.subr.mxu0 0.0
        %1139 = vmatpush2.msra.mxu0 0.0
        %1140 = vmatprep.subr.mxu0 0.0
        %1141 = vmatpush2.msra.mxu0 0.0
        %1142 = vmatprep.subr.mxu0 0.0
        %1143 = vmatpush2.msra.mxu0 0.0
        %1144 = vmatprep.subr.mxu0 0.0
        %1145 = vmatpush2.msra.mxu0 0.0
        %1146 = vmatprep.subr.mxu0 0.0
        %1147 = vmatpush2.msra.mxu0 0.0
        %1148 = vmatprep.subr.mxu0 0.0
        %1149 = vmatpush2.msra.mxu0 0.0
        %1150 = vmatprep.subr.mxu0 0.0
        %1151 = vmatpush2.msra.mxu0 0.0
        %1152 = vmatprep.subr.mxu0 0.0
        %1153 = vmatpush2.msra.mxu0 0.0
        %1154 = vmatprep.subr.mxu0 0.0
        %1155 = vmatpush2.msra.mxu0 0.0
        %1156 = vmatprep.subr.mxu0 0.0
        %1157 = vmatpush2.msra.mxu0 0.0
        %1158 = vmatprep.mubr.f32.mxu0 0.0
        %1159 = vmatmul.mubr.f32.gmra.mxu0 %v1092
        %v1160 = vpop.f32.mrf.mxu0
        %v1161 = vadd.f32 0.0, %v1160
        %v1162 = vpop.f32.mrf.mxu0
        %1163 = vdwg.mxu0
        %v1164 = vadd.f32 %v921, %v1161
        %1165 = vrot.lane.b32.xlu0 %v433, 104
        %v1166 = vpop.permute.xlu0 %1165
        %1167 = vrot.lane.b32.xlu0 %v433, 72
        %v1168 = vpop.permute.xlu0 %1167
        %v1169 = vsel %vm447, %v1166, 0
        %v1171 = vsel %vm447, %v1168, 0
        %1173 = vmatprep.subr.mxu0 0.0
        %1174 = vmatpush1.xpose.msra.mxu0 0.0
        %1175 = vmatprep.subr.mxu0 0.0
        %1176 = vmatpush1.xpose.msra.mxu0 0.0
        %1177 = vmatprep.subr.mxu0 0.0
        %1178 = vmatpush1.xpose.msra.mxu0 0.0
        %1179 = vmatprep.subr.mxu0 0.0
        %1180 = vmatpush1.xpose.msra.mxu0 0.0
        %1181 = vmatprep.subr.mxu0 0.0
        %1182 = vmatpush1.xpose.msra.mxu0 0.0
        %1183 = vmatprep.subr.mxu0 0.0
        %1184 = vmatpush1.xpose.msra.mxu0 0.0
        %1185 = vmatprep.subr.mxu0 0.0
        %1186 = vmatpush1.xpose.msra.mxu0 0.0
        %1187 = vmatprep.subr.mxu0 0.0
        %1188 = vmatpush1.xpose.msra.mxu0 0.0
        %1189 = vmatprep.subr.mxu0 0.0
        %1190 = vmatpush1.xpose.msra.mxu0 0.0
        %1191 = vmatprep.subr.mxu0 0.0
        %1192 = vmatpush1.xpose.msra.mxu0 0.0
        %1193 = vmatprep.subr.mxu0 0.0
        %1194 = vmatpush1.xpose.msra.mxu0 0.0
        %1195 = vmatprep.subr.mxu0 0.0
        %1196 = vmatpush1.xpose.msra.mxu0 0.0
        %1197 = vmatprep.subr.mxu0 0.0
        %1198 = vmatpush1.xpose.msra.mxu0 0.0
        %1199 = vmatprep.subr.mxu0 0.0
        %1200 = vmatpush1.xpose.msra.mxu0 0.0
        %1201 = vmatprep.subr.mxu0 0.0
        %1202 = vmatpush1.xpose.msra.mxu0 0.0
        %1203 = vmatprep.subr.mxu0 0.0
        %1204 = vmatpush1.xpose.msra.mxu0 %v1171
        %1205 = vmatprep.subr.mxu0 0.0
        %1206 = vmatpush2.xpose.msra.mxu0 0.0
        %1207 = vmatprep.subr.mxu0 0.0
        %1208 = vmatpush2.xpose.msra.mxu0 0.0
        %1209 = vmatprep.subr.mxu0 0.0
        %1210 = vmatpush2.xpose.msra.mxu0 0.0
        %1211 = vmatprep.subr.mxu0 0.0
        %1212 = vmatpush2.xpose.msra.mxu0 0.0
        %1213 = vmatprep.subr.mxu0 0.0
        %1214 = vmatpush2.xpose.msra.mxu0 0.0
        %1215 = vmatprep.subr.mxu0 0.0
        %1216 = vmatpush2.xpose.msra.mxu0 0.0
        %1217 = vmatprep.subr.mxu0 0.0
        %1218 = vmatpush2.xpose.msra.mxu0 0.0
        %1219 = vmatprep.subr.mxu0 0.0
        %1220 = vmatpush2.xpose.msra.mxu0 0.0
        %1221 = vmatprep.subr.mxu0 0.0
        %1222 = vmatpush2.xpose.msra.mxu0 0.0
        %1223 = vmatprep.subr.mxu0 0.0
        %1224 = vmatpush2.xpose.msra.mxu0 0.0
        %1225 = vmatprep.subr.mxu0 0.0
        %1226 = vmatpush2.xpose.msra.mxu0 0.0
        %1227 = vmatprep.subr.mxu0 0.0
        %1228 = vmatpush2.xpose.msra.mxu0 0.0
        %1229 = vmatprep.subr.mxu0 0.0
        %1230 = vmatpush2.xpose.msra.mxu0 0.0
        %1231 = vmatprep.subr.mxu0 0.0
        %1232 = vmatpush2.xpose.msra.mxu0 0.0
        %1233 = vmatprep.subr.mxu0 0.0
        %1234 = vmatpush2.xpose.msra.mxu0 0.0
        %1235 = vmatprep.subr.mxu0 0.0
        %1236 = vmatpush2.xpose.msra.mxu0 0.0
        %1237 = vmatprep.mubr.f32.mxu0 0.0
        %1238 = vmatmul.mubr.f32.gmra.mxu0 %v1169
        %v1239 = vpop.f32.mrf.mxu0
        %v1240 = vadd.f32 0.0, %v1239
        %v1241 = vpop.f32.mrf.mxu0
        %1242 = vdwg.mxu0
        %v1243 = vmul.f32 %v1240, 0.17677669
        %v1244 = vadd.f32 %v1243, %v443
        %v1245 = vsel %vm447, %v1244, -inf
        %1246 = vmax.xlane.f32.xlu0 %v1245
        %v1247 = vpop.xlane.xlu0 %1246
        %v1248 = vsub.f32 %v1244, %v1247
        %v1249 = vmul.f32 %v1248, 1.442695
        %v1250 = vpow.pop %v1249
        %v1251 = vsel %vm447, %v1250, 0.0
        %1252 = vadd.xlane.f32.xlu0 %v1251
        %v1253 = vpop.xlane.xlu0 %1252
        %v1254 = vrcp.pop %v1253
        %v1255 = vmul.f32 %v1250, %v1254
        %1256 = vrot.lane.b32.xlu0 %v433, 40
        %v1257 = vpop.permute.xlu0 %1256
        %v1260 = vsel %vm447, %v1255, 0
        %1262 = vmatprep.subr.mxu0 0.0
        %1263 = vmatpush1.msra.mxu0 0.0
        %1264 = vmatprep.subr.mxu0 0.0
        %1265 = vmatpush1.msra.mxu0 0.0
        %1266 = vmatprep.subr.mxu0 0.0
        %1267 = vmatpush1.msra.mxu0 0.0
        %1268 = vmatprep.subr.mxu0 0.0
        %1269 = vmatpush1.msra.mxu0 0.0
        %1270 = vmatprep.subr.mxu0 0.0
        %1271 = vmatpush1.msra.mxu0 0.0
        %1272 = vmatprep.subr.mxu0 0.0
        %1273 = vmatpush1.msra.mxu0 0.0
        %1274 = vmatprep.subr.mxu0 0.0
        %1275 = vmatpush1.msra.mxu0 0.0
        %1276 = vmatprep.subr.mxu0 0.0
        %1277 = vmatpush1.msra.mxu0 0.0
        %1278 = vmatprep.subr.mxu0 0.0
        %1279 = vmatpush1.msra.mxu0 0.0
        %1280 = vmatprep.subr.mxu0 0.0
        %1281 = vmatpush1.msra.mxu0 0.0
        %1282 = vmatprep.subr.mxu0 0.0
        %1283 = vmatpush1.msra.mxu0 0.0
        %1284 = vmatprep.subr.mxu0 0.0
        %1285 = vmatpush1.msra.mxu0 0.0
        %1286 = vmatprep.subr.mxu0 0.0
        %1287 = vmatpush1.msra.mxu0 0.0
        %1288 = vmatprep.subr.mxu0 0.0
        %1289 = vmatpush1.msra.mxu0 0.0
        %1290 = vmatprep.subr.mxu0 0.0
        %1291 = vmatpush1.msra.mxu0 0.0
        %1292 = vmatprep.subr.mxu0 0.0
        %1293 = vmatpush1.msra.mxu0 %v1257
        %1294 = vmatprep.subr.mxu0 0.0
        %1295 = vmatpush2.msra.mxu0 0.0
        %1296 = vmatprep.subr.mxu0 0.0
        %1297 = vmatpush2.msra.mxu0 0.0
        %1298 = vmatprep.subr.mxu0 0.0
        %1299 = vmatpush2.msra.mxu0 0.0
        %1300 = vmatprep.subr.mxu0 0.0
        %1301 = vmatpush2.msra.mxu0 0.0
        %1302 = vmatprep.subr.mxu0 0.0
        %1303 = vmatpush2.msra.mxu0 0.0
        %1304 = vmatprep.subr.mxu0 0.0
        %1305 = vmatpush2.msra.mxu0 0.0
        %1306 = vmatprep.subr.mxu0 0.0
        %1307 = vmatpush2.msra.mxu0 0.0
        %1308 = vmatprep.subr.mxu0 0.0
        %1309 = vmatpush2.msra.mxu0 0.0
        %1310 = vmatprep.subr.mxu0 0.0
        %1311 = vmatpush2.msra.mxu0 0.0
        %1312 = vmatprep.subr.mxu0 0.0
        %1313 = vmatpush2.msra.mxu0 0.0
        %1314 = vmatprep.subr.mxu0 0.0
        %1315 = vmatpush2.msra.mxu0 0.0
        %1316 = vmatprep.subr.mxu0 0.0
        %1317 = vmatpush2.msra.mxu0 0.0
        %1318 = vmatprep.subr.mxu0 0.0
        %1319 = vmatpush2.msra.mxu0 0.0
        %1320 = vmatprep.subr.mxu0 0.0
        %1321 = vmatpush2.msra.mxu0 0.0
        %1322 = vmatprep.subr.mxu0 0.0
        %1323 = vmatpush2.msra.mxu0 0.0
        %1324 = vmatprep.subr.mxu0 0.0
        %1325 = vmatpush2.msra.mxu0 0.0
        %1326 = vmatprep.mubr.f32.mxu0 0.0
        %1327 = vmatmul.mubr.f32.gmra.mxu0 %v1260
        %v1328 = vpop.f32.mrf.mxu0
        %v1329 = vadd.f32 0.0, %v1328
        %v1330 = vpop.f32.mrf.mxu0
        %1331 = vdwg.mxu0
        %v1333 = vsel %vm447, %v1329, 0
        %1335 = vmatprep.subr.mxu0 0.0
        %1336 = vmatpush1.msra.mxu0 0.0
        %1337 = vmatprep.subr.mxu0 0.0
        %1338 = vmatpush1.msra.mxu0 0.0
        %1339 = vmatprep.subr.mxu0 0.0
        %1340 = vmatpush1.msra.mxu0 0.0
        %1341 = vmatprep.subr.mxu0 0.0
        %1342 = vmatpush1.msra.mxu0 0.0
        %1343 = vmatprep.subr.mxu0 0.0
        %1344 = vmatpush1.msra.mxu0 0.0
        %1345 = vmatprep.subr.mxu0 0.0
        %1346 = vmatpush1.msra.mxu0 0.0
        %1347 = vmatprep.subr.mxu0 0.0
        %1348 = vmatpush1.msra.mxu0 0.0
        %1349 = vmatprep.subr.mxu0 0.0
        %1350 = vmatpush1.msra.mxu0 0.0
        %1351 = vmatprep.subr.mxu0 0.0
        %1352 = vmatpush1.msra.mxu0 0.0
        %1353 = vmatprep.subr.mxu0 0.0
        %1354 = vmatpush1.msra.mxu0 0.0
        %1355 = vmatprep.subr.mxu0 0.0
        %1356 = vmatpush1.msra.mxu0 0.0
        %1357 = vmatprep.subr.mxu0 0.0
        %1358 = vmatpush1.msra.mxu0 0.0
        %1359 = vmatprep.subr.mxu0 0.0
        %1360 = vmatpush1.msra.mxu0 0.0
        %1361 = vmatprep.subr.mxu0 0.0
        %1362 = vmatpush1.msra.mxu0 0.0
        %1363 = vmatprep.subr.mxu0 0.0
        %1364 = vmatpush1.msra.mxu0 0.0
        %1365 = vmatprep.subr.mxu0 0.0
        %1366 = vmatpush1.msra.mxu0 %v439
        %1367 = vmatprep.subr.mxu0 0.0
        %1368 = vmatpush2.msra.mxu0 0.0
        %1369 = vmatprep.subr.mxu0 0.0
        %1370 = vmatpush2.msra.mxu0 0.0
        %1371 = vmatprep.subr.mxu0 0.0
        %1372 = vmatpush2.msra.mxu0 0.0
        %1373 = vmatprep.subr.mxu0 0.0
        %1374 = vmatpush2.msra.mxu0 0.0
        %1375 = vmatprep.subr.mxu0 0.0
        %1376 = vmatpush2.msra.mxu0 0.0
        %1377 = vmatprep.subr.mxu0 0.0
        %1378 = vmatpush2.msra.mxu0 0.0
        %1379 = vmatprep.subr.mxu0 0.0
        %1380 = vmatpush2.msra.mxu0 0.0
        %1381 = vmatprep.subr.mxu0 0.0
        %1382 = vmatpush2.msra.mxu0 0.0
        %1383 = vmatprep.subr.mxu0 0.0
        %1384 = vmatpush2.msra.mxu0 0.0
        %1385 = vmatprep.subr.mxu0 0.0
        %1386 = vmatpush2.msra.mxu0 0.0
        %1387 = vmatprep.subr.mxu0 0.0
        %1388 = vmatpush2.msra.mxu0 0.0
        %1389 = vmatprep.subr.mxu0 0.0
        %1390 = vmatpush2.msra.mxu0 0.0
        %1391 = vmatprep.subr.mxu0 0.0
        %1392 = vmatpush2.msra.mxu0 0.0
        %1393 = vmatprep.subr.mxu0 0.0
        %1394 = vmatpush2.msra.mxu0 0.0
        %1395 = vmatprep.subr.mxu0 0.0
        %1396 = vmatpush2.msra.mxu0 0.0
        %1397 = vmatprep.subr.mxu0 0.0
        %1398 = vmatpush2.msra.mxu0 0.0
        %1399 = vmatprep.mubr.f32.mxu0 0.0
        %1400 = vmatmul.mubr.f32.gmra.mxu0 %v1333
        %v1401 = vpop.f32.mrf.mxu0
        %v1402 = vadd.f32 0.0, %v1401
        %v1403 = vpop.f32.mrf.mxu0
        %1404 = vdwg.mxu0
        %v1405 = vadd.f32 %v1164, %v1402
        %v1407 = vlaneseq
        %v1408 = vshrl.u32 %v1407, 7
        %v1409 = vsub.s32 0, %v1408
        %v1410 = vrot.slane %v440, %v1409
        %v1412 = vadd.f32 %v1405, %v1410
        %v1413 = vadd.f32 %v350, %v1412
        %v1414 = vsel %vm362, %v1413, 0.0
        %1415 = vadd.xlane.f32.xlu0 %v1414
        %v1416 = vpop.xlane.xlu0 %1415
        %v1417 = vrcp.pop 32.0
        %v1418 = vmul.f32 %v1416, %v1417
        %v1419 = vsub.f32 %v1413, %v1418
        %v1420 = vmul.f32 %v1419, %v1419
        %v1421 = vsel %vm362, %v1420, 0.0
        %1422 = vadd.xlane.f32.xlu0 %v1421
        %v1423 = vpop.xlane.xlu0 %1422
        %v1424 = vmul.f32 %v1423, %v1417
        %v1425 = vadd.f32 %v1424, 1e-05
        %v1426 = vrsqrt.pop %v1425
        %v1427 = vmul.f32 %v1419, %v1426
        %v1429 = vlaneseq
        %v1430 = vshrl.u32 %v1429, 7
        %v1431 = vsub.s32 0, %v1430
        %v1432 = vrot.slane %v441, %v1431
        %v1434 = vmul.f32 %v1427, %v1432
        %v1436 = vlaneseq
        %v1437 = vshrl.u32 %v1436, 7
        %v1438 = vsub.s32 0, %v1437
        %v1439 = vrot.slane %v442, %v1438
        %v1441 = vadd.f32 %v1434, %v1439
        %1442 = vst.msk [vmem:[%s349] sm:$0xff] %vm362, %v1441
        %s1443 = sand.u32 %s207, 1
        %s1444 = scalar_lea.sflag [#allocation4], %s1443
        %s1445 = sand.u32 %s207, 1
        %s1446 = smul.addr %s1445, 8
        %s1447 = scalar_lea.vmem [#allocation8], %s1446
        // Predicated region
        $region65: #{tpu_custom_call.1} parent=51 // pred_check
          %p1448 = pneg %p217
        $region66: #{tpu_custom_call.1} parent=51 // pred_check_branch
          %1450 = sbr.rel (%p1448) target = $region68
        $region67: #{tpu_custom_call.1} parent=51 // pred_region
          %s1452 = ssub.s32 128, 128
          %1453 = vsyncadd %s1444, %s1452
          %s1454 = smul.addr %s26, 128
          %s1455 = scalar_lea.hbm %s8, %s1454
          %s1457 = sshll.u32 %s1447, 4
          %s1458 = int_to_ptr.vmem [resolvable:$true] %s1457
          %1460 = dma.vmem_to_hbm [thread:$0]  %s1458, 128, %s1455, %s1444
        $region68: #{tpu_custom_call.1} parent=51 // pred_fallthru
          _
      $region52: #{tpu_custom_call.1} parent=5 // pred_fallthru
        _
      %p1461 = scmp.le.s32.totalorder 2, %s21
      // Predicated region
      $region69: #{tpu_custom_call.1} parent=5 // pred_check
        %p1462 = pneg %p1461
      $region70: #{tpu_custom_call.1} parent=5 // pred_check_branch
        %1464 = sbr.rel (%p1462) target = $region72
      $region71: #{tpu_custom_call.1} parent=5 // pred_region
        %s1465 = ssub.s32 %s21, 2
        // Predicated region
        $region73: #{tpu_custom_call.1} parent=71 // pred_check
          %p1466 = pneg %p223
        $region74: #{tpu_custom_call.1} parent=71 // pred_check_branch
          %1468 = sbr.rel (%p1466) target = $region76
        $region75: #{tpu_custom_call.1} parent=71 // pred_region
          %s1469 = sand.u32 %s208, 1
          %s1470 = scalar_lea.sflag [#allocation4], %s1469
          %s1471 = sand.u32 %s208, 1
          %s1472 = smul.addr %s1471, 8
          %s1473 = scalar_lea.vmem [#allocation8], %s1472
          %1474 = dma.done %s1470, 128
        $region76: #{tpu_custom_call.1} parent=71 // pred_fallthru
          _
      $region72: #{tpu_custom_call.1} parent=5 // pred_fallthru
        _
    $region6: #{tpu_custom_call.1} parent=1 // loop_footer
      %s25 = sadd.s32 1, %s21
    $region7: #{tpu_custom_call.1} parent=1 // loop_footer_branch
      %20 = sbr.rel target = $region3
    $region8: #{tpu_custom_call.1} parent=1 // loop_exit
      _
    %1475 = vsyncpa [#allocation3], 1
    %s1476 = scalar_lea.sflag [#allocation3], 1
    %1477 = vsyncpa %s1476, 1
    %1478 = vsyncpa [#allocation6], 1
    %1479 = vsyncpa [#allocation4], 1
    %s1480 = scalar_lea.sflag [#allocation4], 1
    %1481 = vsyncpa %s1480, 1

</llo_original>
